<compile_context>
chip_gen: v7x
topology: tpu7x:2x2x1
jax: 0.10.0
libtpu: 0.0.40
codegen_flags: <defaults>
</compile_context>

<pallas_src>
import functools

import jax
import jax.numpy as jnp
from jax import lax
from jax.experimental import pallas as pl
from jax.experimental.pallas import tpu as pltpu


def _round_up(a: int, b: int) -> int:
    return (a + b - 1) // b * b


def _pick_hp_per_tile(batch: int, hp: int, wp: int, target_rows: int) -> int:
    """Patch-rows per grid step.

    Largest divisor of `hp` whose per-step output tile (hp_per_tile * wp rows)
    stays under `target_rows` (generation-aware: ~1024 rows fits v7x's 64 MiB
    VMEM comfortably at real ViT widths; v5e/v6e with 128 MiB can go to ~2048,
    raising vmem_limit_bytes), while keeping >= 2 grid steps so both of v7x's
    TensorCores get a "parallel" tile.
    """
    total_rows = batch * hp
    best = 1
    for d in range(1, hp + 1):
        if hp % d != 0:
            continue
        if d * wp > target_rows:
            continue
        if total_rows // d < 2 and total_rows >= 2:
            continue
        best = d
    return best


# ----------------------------- Pallas kernel ------------------------------ #
def _patch_embed_kernel(x_ref, w_ref, add_ref, out_ref, *, hp_per_tile, p):
    """One grid step = `hp_per_tile` rows of patches of one image.

    x_ref:   (hp_per_tile*p, Wp, p*C)  NHWC pixel rows (lane dim = p*C),
                                       matmul dtype (bf16 fast path / f32 exact)
    w_ref:   (p, p*C, Ep)              per-pixel-row weight slices,
                                       grid-invariant (DMA'd once, VMEM-resident)
    add_ref: (hp_per_tile, Wp, Ep)     f32 (conv bias + abs-pos), grid-invariant
    out_ref: (hp_per_tile, Wp, Ep)     lane-dense output patch rows

    The stride==kernel conv is out[pr, wp, :] = add[pr, wp, :] +
        sum_ph  x[pr*p + ph, wp, :] @ w[ph]   (MXU, f32 accumulation).
    Patch extraction therefore happens entirely inside the kernel's DMA/tiling;
    no patchified copy of the input ever exists in HBM.
    """
    # TODO(synk): for production sizes (p=16, hp_per_tile up to 64) turn these
    # static unrolls into lax.fori_loop / an extra grid axis to bound code size.
    for pr in range(hp_per_tile):                  # static unroll (small here)
        acc = add_ref[pr].astype(jnp.float32)      # (Wp, Ep), f32 epilogue (v5e-safe)
        for ph in range(p):                        # conv row accumulation
            acc = acc + jnp.dot(x_ref[pr * p + ph], w_ref[ph],
                                preferred_element_type=jnp.float32)
        out_ref[pr] = acc.astype(out_ref.dtype)


# --------------------- Parameter-side preprocessing ------------------------ #
def prepare_vit_params(conv_w, conv_b, pos_embed, *, img_size, patch_size,
                       pretrain_use_cls_token=True, matmul_dtype=jnp.bfloat16):
    """Hoisted out of the per-forward path (review #4): weight relayout,
    E-padding, bf16 cast and (bias + abs-pos) folding are done once."""
    E, C, p, p2 = conv_w.shape
    assert p == p2 == patch_size
    Hp = Wp = img_size // patch_size
    pC = p * C
    Ep = _round_up(E, 128)                 # lane-dense N/output; no-op when E%128==0

    # Weight as (p, p*C, Ep): w_r[ph, pw*C + c, e] = conv_w[e, c, ph, pw],
    # matching the NHWC pixel-row flattening used by the kernel.
    w_r = jnp.transpose(conv_w, (2, 3, 1, 0)).reshape(p, pC, E)
    w_pad = jnp.zeros((p, pC, Ep), matmul_dtype).at[:, :, :E].set(
        w_r.astype(matmul_dtype))

    # (bias + abs-pos) folded into ONE small per-image additive operand.
    # TODO(synk): get_abs_pos interpolation is not implemented (the truncated
    # module only drops the cls token); the torch broadcast
    # (B,E,Hp,Wp) + (1,Np_pre,E_pos) only type-checks when Np_pre in {1,Hp} and
    # E_pos in {1,Wp}, and is per-(h,w) / channel-independent — reproduced as-is.
    pos_sliced = pos_embed[:, 1:] if pretrain_use_cls_token else pos_embed
    np_pre, e_pos = pos_sliced.shape[1], pos_sliced.shape[2]
    assert np_pre in (1, Hp) and e_pos in (1, Wp), (
        "pos_embed shape is incompatible with the module's broadcast at these sizes")
    pos2d = jnp.broadcast_to(pos_sliced[0], (Hp, Wp)).astype(jnp.float32)
    add = pos2d[:, :, None] + conv_b.astype(jnp.float32)[None, None, :]   # (Hp, Wp, E)
    add_pad = jnp.zeros((Hp, Wp, Ep), jnp.float32).at[:, :, :E].set(add)

    return {
        "w": w_pad, "add": add_pad,
        "embed_dim": E, "in_chans": C, "patch_size": p,
        "hp": Hp, "wp": Wp, "ep": Ep, "matmul_dtype": matmul_dtype,
    }


# ------------------------------- Forward ----------------------------------- #
def vit_forward(x, params, *, out_dtype=jnp.float32, target_rows_per_tile=1024):
    """Reproduces ViT.forward of the provided module.

    x: (B, C, H, W) NCHW float32 input.
    returns {'last_feat': (B, Wp, E, Hp)}  (== NCHW conv output .permute(0,3,1,2))
    """
    B, C, H, W = x.shape
    p = params["patch_size"]
    Hp, Wp, E, Ep = params["hp"], params["wp"], params["embed_dim"], params["ep"]
    assert C == params["in_chans"] and H == Hp * p and W == Wp * p
    pC = p * C
    w_pad, add_pad = params["w"], params["add"]
    mdt = params["matmul_dtype"]

    # Single NCHW->NHWC pass (fuses with the cast under jit); everything after
    # is a *free* contiguous reshape — no HBM patchify / pad pass (review #1).
    x_nhwc = jnp.transpose(x, (0, 2, 3, 1)).astype(mdt)      # (B, H, W, C)
    x_rows = x_nhwc.reshape(B * H, Wp, pC)                   # pixel rows, free view

    hp_per_tile = _pick_hp_per_tile(B, Hp, Wp, target_rows_per_tile)
    n_hp_blocks = Hp // hp_per_tile
    grid = (B * Hp // hp_per_tile,)                          # >= 2 steps (v7x, review #5)

    kernel = functools.partial(_patch_embed_kernel, hp_per_tile=hp_per_tile, p=p)

    def _run(single_buffer_invariant):
        inv_kw = {}
        if single_buffer_invariant and hasattr(pl, "Buffered"):
            # Grid-invariant operands don't need double buffering (review #8).
            inv_kw = {"pipeline_mode": pl.Buffered(1)}
        in_specs = [
            # pixel rows of this tile's patch-rows (the only per-step DMA)
            pl.BlockSpec((hp_per_tile * p, Wp, pC), lambda i: (i, 0, 0)),
            # full weight, grid-invariant -> fetched once, VMEM-resident
            pl.BlockSpec((p, pC, Ep), lambda i: (0, 0, 0), **inv_kw),
            # per-image (bias + pos) operand, modular index (grid-invariant here)
            pl.BlockSpec((hp_per_tile, Wp, Ep),
                         lambda i: (i % n_hp_blocks, 0, 0), **inv_kw),
        ]
        out_spec = pl.BlockSpec((hp_per_tile, Wp, Ep), lambda i: (i, 0, 0))
        y = pl.pallas_call(
            kernel,
            out_shape=jax.ShapeDtypeStruct((B * Hp, Wp, Ep), out_dtype),
            grid=grid,
            in_specs=in_specs,
            out_specs=out_spec,
            # TODO(synk): for real ViT sizes raise vmem_limit_bytes here when
            # growing hp_per_tile on v5e/v6e (128 MiB VMEM); keep ~1024 output
            # rows per tile on v7x (64 MiB VMEM).
            compiler_params=pltpu.CompilerParams(
                dimension_semantics=("parallel",)),
        )(x_rows, w_pad, add_pad)
        return jax.block_until_ready(y)

    try:
        y_pad = _run(True)
    except Exception:
        # pipeline_mode=pl.Buffered(1) not supported by this jax/libtpu combo;
        # fall back to default double buffering (semantics identical).
        y_pad = _run(False)

    # Blocks are identity.  Final x.permute(0, 3, 1, 2) of the NCHW conv output
    # z[b,e,h,w] gives out[b,w,e,h]; from the (B*Hp, Wp, E) slab that is a
    # slice + single transpose.
    y = y_pad[:, :, :E].reshape(B, Hp, Wp, E)                # y[b,h,w,e] = z[b,e,h,w]
    out = jnp.transpose(y, (0, 2, 3, 1))                     # (B, Wp, E, Hp)
    return {"last_feat": out}


# ---------------------------- Pure-JAX reference --------------------------- #
def vit_forward_ref(x, conv_w, conv_b, pos_embed, *, patch_size,
                    pretrain_use_cls_token=True):
    p = patch_size
    E = conv_w.shape[0]
    z = lax.conv_general_dilated(
        x, conv_w, window_strides=(p, p), padding="VALID",
        dimension_numbers=("NCHW", "OIHW", "NCHW"))
    z = z + conv_b.reshape(1, E, 1, 1)
    pos = pos_embed[:, 1:] if pretrain_use_cls_token else pos_embed
    z = z + pos                                              # torch-style broadcast
    return {"last_feat": jnp.transpose(z, (0, 3, 1, 2))}


# ---------------------------------- main ----------------------------------- #
if __name__ == "__main__":
    # Small hyperparameters consistent with the module's forward (see NOTE).
    B, C = 2, 3
    img_size, patch_size = 16, 4
    embed_dim = 4
    pretrain_img_size = 8
    Np_pre = (pretrain_img_size // patch_size) ** 2          # 4 == Hp
    num_positions = Np_pre + 1                               # cls token

    key = jax.random.PRNGKey(0)
    k_w, k_b, k_pos, k_x = jax.random.split(key, 4)

    # Deterministic synthetic parameters (shapes from ViT.__init__):
    conv_w = 0.02 * jax.random.normal(
        k_w, (embed_dim, C, patch_size, patch_size), jnp.float32)
    conv_b = 0.02 * jax.random.normal(k_b, (embed_dim,), jnp.float32)
    pos_embed = 0.02 * jax.random.normal(
        k_pos, (1, num_positions, embed_dim), jnp.float32)   # trunc_normal(std=.02) approx

    x = jax.random.normal(k_x, (B, C, img_size, img_size), jnp.float32)

    # Parameter-side preprocessing hoisted out of the forward path (review #4).
    params_bf16 = prepare_vit_params(
        conv_w, conv_b, pos_embed, img_size=img_size, patch_size=patch_size,
        matmul_dtype=jnp.bfloat16)
    params_f32 = prepare_vit_params(
        conv_w, conv_b, pos_embed, img_size=img_size, patch_size=patch_size,
        matmul_dtype=jnp.float32)

    # Fast path: bf16 MXU inputs (v6e/v7x), f32 accumulation + f32 epilogue.
    out_bf16 = vit_forward(x, params_bf16)["last_feat"]
    out_bf16 = jax.block_until_ready(out_bf16)

    # Exact-semantics path: f32 MXU inputs.
    out_f32 = vit_forward(x, params_f32)["last_feat"]
    out_f32 = jax.block_until_ready(out_f32)

    ref = vit_forward_ref(x, conv_w, conv_b, pos_embed, patch_size=patch_size)
    ref_feat = jax.block_until_ready(ref["last_feat"])

    expected_shape = (B, img_size // patch_size, embed_dim,
                      img_size // patch_size)
    assert out_bf16.shape == out_f32.shape == ref_feat.shape == expected_shape
    assert jnp.allclose(out_f32, ref_feat, atol=1e-4, rtol=1e-4)
    assert jnp.allclose(out_bf16, ref_feat, atol=2e-2, rtol=2e-2)

    print("KERNEL_OK")
</pallas_src>

<mosaic_0001>
module attributes {stable_mosaic.version = 11 : i64} {
  func.func @_patch_embed_kernel(%arg0: i32, %arg1: memref<16x4x12xbf16, #tpu.memory_space<vmem>>, %arg2: memref<4x12x128xbf16, #tpu.memory_space<vmem>>, %arg3: memref<4x4x128xf32, #tpu.memory_space<vmem>>, %arg4: memref<4x4x128xf32, #tpu.memory_space<vmem>>) attributes {dimension_semantics = [#tpu.dimension_semantics<parallel>], iteration_bounds = array<i64: 2>, scalar_prefetch = 0 : i64, scratch_operands = 0 : i64, tpu.core_type = #tpu.core_type<tc>, window_params = [{transform_indices = @transform_0, window_bounds = array<i64: 16, 4, 12>}, {pipeline_mode = #tpu.pipeline_mode<synchronous>, transform_indices = @transform_1, window_bounds = array<i64: 4, 12, 128>}, {pipeline_mode = #tpu.pipeline_mode<synchronous>, transform_indices = @transform_2, window_bounds = array<i64: 4, 4, 128>}, {transform_indices = @transform_3, window_bounds = array<i64: 4, 4, 128>}]} {
    %c0 = arith.constant 0 : index
    %c0_0 = arith.constant 0 : index
    %c0_1 = arith.constant 0 : index
    %0 = vector.load %arg3[%c0, %c0_0, %c0_1] : memref<4x4x128xf32, #tpu.memory_space<vmem>>, vector<1x4x128xf32>
    %1 = vector.shape_cast %0 : vector<1x4x128xf32> to vector<4x128xf32>
    %c0_2 = arith.constant 0 : index
    %c0_3 = arith.constant 0 : index
    %c0_4 = arith.constant 0 : index
    %2 = vector.load %arg1[%c0_2, %c0_3, %c0_4] : memref<16x4x12xbf16, #tpu.memory_space<vmem>>, vector<1x4x12xbf16>
    %3 = vector.shape_cast %2 : vector<1x4x12xbf16> to vector<4x12xbf16>
    %c0_5 = arith.constant 0 : index
    %c0_6 = arith.constant 0 : index
    %c0_7 = arith.constant 0 : index
    %4 = vector.load %arg2[%c0_5, %c0_6, %c0_7] : memref<4x12x128xbf16, #tpu.memory_space<vmem>>, vector<1x12x128xbf16>
    %5 = vector.shape_cast %4 : vector<1x12x128xbf16> to vector<12x128xbf16>
    %cst = arith.constant dense<0.000000e+00> : vector<4x128xf32>
    %6 = tpu.matmul %3, %5, %cst {dimension_numbers = #tpu.dot_dimension_numbers<[1], [0], [0], [1], [0, 0, 1, 1], [], []>} : vector<4x12xbf16>, vector<12x128xbf16>, vector<4x128xf32> -> vector<4x128xf32>
    %7 = arith.addf %1, %6 : vector<4x128xf32>
    %c1 = arith.constant 1 : index
    %c0_8 = arith.constant 0 : index
    %c0_9 = arith.constant 0 : index
    %8 = vector.load %arg1[%c1, %c0_8, %c0_9] : memref<16x4x12xbf16, #tpu.memory_space<vmem>>, vector<1x4x12xbf16>
    %9 = vector.shape_cast %8 : vector<1x4x12xbf16> to vector<4x12xbf16>
    %c1_10 = arith.constant 1 : index
    %c0_11 = arith.constant 0 : index
    %c0_12 = arith.constant 0 : index
    %10 = vector.load %arg2[%c1_10, %c0_11, %c0_12] : memref<4x12x128xbf16, #tpu.memory_space<vmem>>, vector<1x12x128xbf16>
    %11 = vector.shape_cast %10 : vector<1x12x128xbf16> to vector<12x128xbf16>
    %cst_13 = arith.constant dense<0.000000e+00> : vector<4x128xf32>
    %12 = tpu.matmul %9, %11, %cst_13 {dimension_numbers = #tpu.dot_dimension_numbers<[1], [0], [0], [1], [0, 0, 1, 1], [], []>} : vector<4x12xbf16>, vector<12x128xbf16>, vector<4x128xf32> -> vector<4x128xf32>
    %13 = arith.addf %7, %12 : vector<4x128xf32>
    %c2 = arith.constant 2 : index
    %c0_14 = arith.constant 0 : index
    %c0_15 = arith.constant 0 : index
    %14 = vector.load %arg1[%c2, %c0_14, %c0_15] : memref<16x4x12xbf16, #tpu.memory_space<vmem>>, vector<1x4x12xbf16>
    %15 = vector.shape_cast %14 : vector<1x4x12xbf16> to vector<4x12xbf16>
    %c2_16 = arith.constant 2 : index
    %c0_17 = arith.constant 0 : index
    %c0_18 = arith.constant 0 : index
    %16 = vector.load %arg2[%c2_16, %c0_17, %c0_18] : memref<4x12x128xbf16, #tpu.memory_space<vmem>>, vector<1x12x128xbf16>
    %17 = vector.shape_cast %16 : vector<1x12x128xbf16> to vector<12x128xbf16>
    %cst_19 = arith.constant dense<0.000000e+00> : vector<4x128xf32>
    %18 = tpu.matmul %15, %17, %cst_19 {dimension_numbers = #tpu.dot_dimension_numbers<[1], [0], [0], [1], [0, 0, 1, 1], [], []>} : vector<4x12xbf16>, vector<12x128xbf16>, vector<4x128xf32> -> vector<4x128xf32>
    %19 = arith.addf %13, %18 : vector<4x128xf32>
    %c3 = arith.constant 3 : index
    %c0_20 = arith.constant 0 : index
    %c0_21 = arith.constant 0 : index
    %20 = vector.load %arg1[%c3, %c0_20, %c0_21] : memref<16x4x12xbf16, #tpu.memory_space<vmem>>, vector<1x4x12xbf16>
    %21 = vector.shape_cast %20 : vector<1x4x12xbf16> to vector<4x12xbf16>
    %c3_22 = arith.constant 3 : index
    %c0_23 = arith.constant 0 : index
    %c0_24 = arith.constant 0 : index
    %22 = vector.load %arg2[%c3_22, %c0_23, %c0_24] : memref<4x12x128xbf16, #tpu.memory_space<vmem>>, vector<1x12x128xbf16>
    %23 = vector.shape_cast %22 : vector<1x12x128xbf16> to vector<12x128xbf16>
    %cst_25 = arith.constant dense<0.000000e+00> : vector<4x128xf32>
    %24 = tpu.matmul %21, %23, %cst_25 {dimension_numbers = #tpu.dot_dimension_numbers<[1], [0], [0], [1], [0, 0, 1, 1], [], []>} : vector<4x12xbf16>, vector<12x128xbf16>, vector<4x128xf32> -> vector<4x128xf32>
    %25 = arith.addf %19, %24 : vector<4x128xf32>
    %c0_26 = arith.constant 0 : index
    %c0_27 = arith.constant 0 : index
    %c0_28 = arith.constant 0 : index
    %26 = vector.load %arg4[%c0_26, %c0_27, %c0_28] : memref<4x4x128xf32, #tpu.memory_space<vmem>>, vector<1x4x128xf32>
    %27 = vector.shape_cast %26 : vector<1x4x128xf32> to vector<4x128xf32>
    %28 = vector.shape_cast %25 : vector<4x128xf32> to vector<1x4x128xf32>
    tpu.vector_store %arg4[%c0_26, %c0_27, %c0_28], %28 {strides = array<i32>} : memref<4x4x128xf32, #tpu.memory_space<vmem>>, vector<1x4x128xf32>,
    %c1_29 = arith.constant 1 : index
    %c0_30 = arith.constant 0 : index
    %c0_31 = arith.constant 0 : index
    %29 = vector.load %arg3[%c1_29, %c0_30, %c0_31] : memref<4x4x128xf32, #tpu.memory_space<vmem>>, vector<1x4x128xf32>
    %30 = vector.shape_cast %29 : vector<1x4x128xf32> to vector<4x128xf32>
    %c4 = arith.constant 4 : index
    %c0_32 = arith.constant 0 : index
    %c0_33 = arith.constant 0 : index
    %31 = vector.load %arg1[%c4, %c0_32, %c0_33] : memref<16x4x12xbf16, #tpu.memory_space<vmem>>, vector<1x4x12xbf16>
    %32 = vector.shape_cast %31 : vector<1x4x12xbf16> to vector<4x12xbf16>
    %c0_34 = arith.constant 0 : index
    %c0_35 = arith.constant 0 : index
    %c0_36 = arith.constant 0 : index
    %33 = vector.load %arg2[%c0_34, %c0_35, %c0_36] : memref<4x12x128xbf16, #tpu.memory_space<vmem>>, vector<1x12x128xbf16>
    %34 = vector.shape_cast %33 : vector<1x12x128xbf16> to vector<12x128xbf16>
    %cst_37 = arith.constant dense<0.000000e+00> : vector<4x128xf32>
    %35 = tpu.matmul %32, %34, %cst_37 {dimension_numbers = #tpu.dot_dimension_numbers<[1], [0], [0], [1], [0, 0, 1, 1], [], []>} : vector<4x12xbf16>, vector<12x128xbf16>, vector<4x128xf32> -> vector<4x128xf32>
    %36 = arith.addf %30, %35 : vector<4x128xf32>
    %c5 = arith.constant 5 : index
    %c0_38 = arith.constant 0 : index
    %c0_39 = arith.constant 0 : index
    %37 = vector.load %arg1[%c5, %c0_38, %c0_39] : memref<16x4x12xbf16, #tpu.memory_space<vmem>>, vector<1x4x12xbf16>
    %38 = vector.shape_cast %37 : vector<1x4x12xbf16> to vector<4x12xbf16>
    %c1_40 = arith.constant 1 : index
    %c0_41 = arith.constant 0 : index
    %c0_42 = arith.constant 0 : index
    %39 = vector.load %arg2[%c1_40, %c0_41, %c0_42] : memref<4x12x128xbf16, #tpu.memory_space<vmem>>, vector<1x12x128xbf16>
    %40 = vector.shape_cast %39 : vector<1x12x128xbf16> to vector<12x128xbf16>
    %cst_43 = arith.constant dense<0.000000e+00> : vector<4x128xf32>
    %41 = tpu.matmul %38, %40, %cst_43 {dimension_numbers = #tpu.dot_dimension_numbers<[1], [0], [0], [1], [0, 0, 1, 1], [], []>} : vector<4x12xbf16>, vector<12x128xbf16>, vector<4x128xf32> -> vector<4x128xf32>
    %42 = arith.addf %36, %41 : vector<4x128xf32>
    %c6 = arith.constant 6 : index
    %c0_44 = arith.constant 0 : index
    %c0_45 = arith.constant 0 : index
    %43 = vector.load %arg1[%c6, %c0_44, %c0_45] : memref<16x4x12xbf16, #tpu.memory_space<vmem>>, vector<1x4x12xbf16>
    %44 = vector.shape_cast %43 : vector<1x4x12xbf16> to vector<4x12xbf16>
    %c2_46 = arith.constant 2 : index
    %c0_47 = arith.constant 0 : index
    %c0_48 = arith.constant 0 : index
    %45 = vector.load %arg2[%c2_46, %c0_47, %c0_48] : memref<4x12x128xbf16, #tpu.memory_space<vmem>>, vector<1x12x128xbf16>
    %46 = vector.shape_cast %45 : vector<1x12x128xbf16> to vector<12x128xbf16>
    %cst_49 = arith.constant dense<0.000000e+00> : vector<4x128xf32>
    %47 = tpu.matmul %44, %46, %cst_49 {dimension_numbers = #tpu.dot_dimension_numbers<[1], [0], [0], [1], [0, 0, 1, 1], [], []>} : vector<4x12xbf16>, vector<12x128xbf16>, vector<4x128xf32> -> vector<4x128xf32>
    %48 = arith.addf %42, %47 : vector<4x128xf32>
    %c7 = arith.constant 7 : index
    %c0_50 = arith.constant 0 : index
    %c0_51 = arith.constant 0 : index
    %49 = vector.load %arg1[%c7, %c0_50, %c0_51] : memref<16x4x12xbf16, #tpu.memory_space<vmem>>, vector<1x4x12xbf16>
    %50 = vector.shape_cast %49 : vector<1x4x12xbf16> to vector<4x12xbf16>
    %c3_52 = arith.constant 3 : index
    %c0_53 = arith.constant 0 : index
    %c0_54 = arith.constant 0 : index
    %51 = vector.load %arg2[%c3_52, %c0_53, %c0_54] : memref<4x12x128xbf16, #tpu.memory_space<vmem>>, vector<1x12x128xbf16>
    %52 = vector.shape_cast %51 : vector<1x12x128xbf16> to vector<12x128xbf16>
    %cst_55 = arith.constant dense<0.000000e+00> : vector<4x128xf32>
    %53 = tpu.matmul %50, %52, %cst_55 {dimension_numbers = #tpu.dot_dimension_numbers<[1], [0], [0], [1], [0, 0, 1, 1], [], []>} : vector<4x12xbf16>, vector<12x128xbf16>, vector<4x128xf32> -> vector<4x128xf32>
    %54 = arith.addf %48, %53 : vector<4x128xf32>
    %c1_56 = arith.constant 1 : index
    %c0_57 = arith.constant 0 : index
    %c0_58 = arith.constant 0 : index
    %55 = vector.load %arg4[%c1_56, %c0_57, %c0_58] : memref<4x4x128xf32, #tpu.memory_space<vmem>>, vector<1x4x128xf32>
    %56 = vector.shape_cast %55 : vector<1x4x128xf32> to vector<4x128xf32>
    %57 = vector.shape_cast %54 : vector<4x128xf32> to vector<1x4x128xf32>
    tpu.vector_store %arg4[%c1_56, %c0_57, %c0_58], %57 {strides = array<i32>} : memref<4x4x128xf32, #tpu.memory_space<vmem>>, vector<1x4x128xf32>,
    %c2_59 = arith.constant 2 : index
    %c0_60 = arith.constant 0 : index
    %c0_61 = arith.constant 0 : index
    %58 = vector.load %arg3[%c2_59, %c0_60, %c0_61] : memref<4x4x128xf32, #tpu.memory_space<vmem>>, vector<1x4x128xf32>
    %59 = vector.shape_cast %58 : vector<1x4x128xf32> to vector<4x128xf32>
    %c8 = arith.constant 8 : index
    %c0_62 = arith.constant 0 : index
    %c0_63 = arith.constant 0 : index
    %60 = vector.load %arg1[%c8, %c0_62, %c0_63] : memref<16x4x12xbf16, #tpu.memory_space<vmem>>, vector<1x4x12xbf16>
    %61 = vector.shape_cast %60 : vector<1x4x12xbf16> to vector<4x12xbf16>
    %c0_64 = arith.constant 0 : index
    %c0_65 = arith.constant 0 : index
    %c0_66 = arith.constant 0 : index
    %62 = vector.load %arg2[%c0_64, %c0_65, %c0_66] : memref<4x12x128xbf16, #tpu.memory_space<vmem>>, vector<1x12x128xbf16>
    %63 = vector.shape_cast %62 : vector<1x12x128xbf16> to vector<12x128xbf16>
    %cst_67 = arith.constant dense<0.000000e+00> : vector<4x128xf32>
    %64 = tpu.matmul %61, %63, %cst_67 {dimension_numbers = #tpu.dot_dimension_numbers<[1], [0], [0], [1], [0, 0, 1, 1], [], []>} : vector<4x12xbf16>, vector<12x128xbf16>, vector<4x128xf32> -> vector<4x128xf32>
    %65 = arith.addf %59, %64 : vector<4x128xf32>
    %c9 = arith.constant 9 : index
    %c0_68 = arith.constant 0 : index
    %c0_69 = arith.constant 0 : index
    %66 = vector.load %arg1[%c9, %c0_68, %c0_69] : memref<16x4x12xbf16, #tpu.memory_space<vmem>>, vector<1x4x12xbf16>
    %67 = vector.shape_cast %66 : vector<1x4x12xbf16> to vector<4x12xbf16>
    %c1_70 = arith.constant 1 : index
    %c0_71 = arith.constant 0 : index
    %c0_72 = arith.constant 0 : index
    %68 = vector.load %arg2[%c1_70, %c0_71, %c0_72] : memref<4x12x128xbf16, #tpu.memory_space<vmem>>, vector<1x12x128xbf16>
    %69 = vector.shape_cast %68 : vector<1x12x128xbf16> to vector<12x128xbf16>
    %cst_73 = arith.constant dense<0.000000e+00> : vector<4x128xf32>
    %70 = tpu.matmul %67, %69, %cst_73 {dimension_numbers = #tpu.dot_dimension_numbers<[1], [0], [0], [1], [0, 0, 1, 1], [], []>} : vector<4x12xbf16>, vector<12x128xbf16>, vector<4x128xf32> -> vector<4x128xf32>
    %71 = arith.addf %65, %70 : vector<4x128xf32>
    %c10 = arith.constant 10 : index
    %c0_74 = arith.constant 0 : index
    %c0_75 = arith.constant 0 : index
    %72 = vector.load %arg1[%c10, %c0_74, %c0_75] : memref<16x4x12xbf16, #tpu.memory_space<vmem>>, vector<1x4x12xbf16>
    %73 = vector.shape_cast %72 : vector<1x4x12xbf16> to vector<4x12xbf16>
    %c2_76 = arith.constant 2 : index
    %c0_77 = arith.constant 0 : index
    %c0_78 = arith.constant 0 : index
    %74 = vector.load %arg2[%c2_76, %c0_77, %c0_78] : memref<4x12x128xbf16, #tpu.memory_space<vmem>>, vector<1x12x128xbf16>
    %75 = vector.shape_cast %74 : vector<1x12x128xbf16> to vector<12x128xbf16>
    %cst_79 = arith.constant dense<0.000000e+00> : vector<4x128xf32>
    %76 = tpu.matmul %73, %75, %cst_79 {dimension_numbers = #tpu.dot_dimension_numbers<[1], [0], [0], [1], [0, 0, 1, 1], [], []>} : vector<4x12xbf16>, vector<12x128xbf16>, vector<4x128xf32> -> vector<4x128xf32>
    %77 = arith.addf %71, %76 : vector<4x128xf32>
    %c11 = arith.constant 11 : index
    %c0_80 = arith.constant 0 : index
    %c0_81 = arith.constant 0 : index
    %78 = vector.load %arg1[%c11, %c0_80, %c0_81] : memref<16x4x12xbf16, #tpu.memory_space<vmem>>, vector<1x4x12xbf16>
    %79 = vector.shape_cast %78 : vector<1x4x12xbf16> to vector<4x12xbf16>
    %c3_82 = arith.constant 3 : index
    %c0_83 = arith.constant 0 : index
    %c0_84 = arith.constant 0 : index
    %80 = vector.load %arg2[%c3_82, %c0_83, %c0_84] : memref<4x12x128xbf16, #tpu.memory_space<vmem>>, vector<1x12x128xbf16>
    %81 = vector.shape_cast %80 : vector<1x12x128xbf16> to vector<12x128xbf16>
    %cst_85 = arith.constant dense<0.000000e+00> : vector<4x128xf32>
    %82 = tpu.matmul %79, %81, %cst_85 {dimension_numbers = #tpu.dot_dimension_numbers<[1], [0], [0], [1], [0, 0, 1, 1], [], []>} : vector<4x12xbf16>, vector<12x128xbf16>, vector<4x128xf32> -> vector<4x128xf32>
    %83 = arith.addf %77, %82 : vector<4x128xf32>
    %c2_86 = arith.constant 2 : index
    %c0_87 = arith.constant 0 : index
    %c0_88 = arith.constant 0 : index
    %84 = vector.load %arg4[%c2_86, %c0_87, %c0_88] : memref<4x4x128xf32, #tpu.memory_space<vmem>>, vector<1x4x128xf32>
    %85 = vector.shape_cast %84 : vector<1x4x128xf32> to vector<4x128xf32>
    %86 = vector.shape_cast %83 : vector<4x128xf32> to vector<1x4x128xf32>
    tpu.vector_store %arg4[%c2_86, %c0_87, %c0_88], %86 {strides = array<i32>} : memref<4x4x128xf32, #tpu.memory_space<vmem>>, vector<1x4x128xf32>,
    %c3_89 = arith.constant 3 : index
    %c0_90 = arith.constant 0 : index
    %c0_91 = arith.constant 0 : index
    %87 = vector.load %arg3[%c3_89, %c0_90, %c0_91] : memref<4x4x128xf32, #tpu.memory_space<vmem>>, vector<1x4x128xf32>
    %88 = vector.shape_cast %87 : vector<1x4x128xf32> to vector<4x128xf32>
    %c12 = arith.constant 12 : index
    %c0_92 = arith.constant 0 : index
    %c0_93 = arith.constant 0 : index
    %89 = vector.load %arg1[%c12, %c0_92, %c0_93] : memref<16x4x12xbf16, #tpu.memory_space<vmem>>, vector<1x4x12xbf16>
    %90 = vector.shape_cast %89 : vector<1x4x12xbf16> to vector<4x12xbf16>
    %c0_94 = arith.constant 0 : index
    %c0_95 = arith.constant 0 : index
    %c0_96 = arith.constant 0 : index
    %91 = vector.load %arg2[%c0_94, %c0_95, %c0_96] : memref<4x12x128xbf16, #tpu.memory_space<vmem>>, vector<1x12x128xbf16>
    %92 = vector.shape_cast %91 : vector<1x12x128xbf16> to vector<12x128xbf16>
    %cst_97 = arith.constant dense<0.000000e+00> : vector<4x128xf32>
    %93 = tpu.matmul %90, %92, %cst_97 {dimension_numbers = #tpu.dot_dimension_numbers<[1], [0], [0], [1], [0, 0, 1, 1], [], []>} : vector<4x12xbf16>, vector<12x128xbf16>, vector<4x128xf32> -> vector<4x128xf32>
    %94 = arith.addf %88, %93 : vector<4x128xf32>
    %c13 = arith.constant 13 : index
    %c0_98 = arith.constant 0 : index
    %c0_99 = arith.constant 0 : index
    %95 = vector.load %arg1[%c13, %c0_98, %c0_99] : memref<16x4x12xbf16, #tpu.memory_space<vmem>>, vector<1x4x12xbf16>
    %96 = vector.shape_cast %95 : vector<1x4x12xbf16> to vector<4x12xbf16>
    %c1_100 = arith.constant 1 : index
    %c0_101 = arith.constant 0 : index
    %c0_102 = arith.constant 0 : index
    %97 = vector.load %arg2[%c1_100, %c0_101, %c0_102] : memref<4x12x128xbf16, #tpu.memory_space<vmem>>, vector<1x12x128xbf16>
    %98 = vector.shape_cast %97 : vector<1x12x128xbf16> to vector<12x128xbf16>
    %cst_103 = arith.constant dense<0.000000e+00> : vector<4x128xf32>
    %99 = tpu.matmul %96, %98, %cst_103 {dimension_numbers = #tpu.dot_dimension_numbers<[1], [0], [0], [1], [0, 0, 1, 1], [], []>} : vector<4x12xbf16>, vector<12x128xbf16>, vector<4x128xf32> -> vector<4x128xf32>
    %100 = arith.addf %94, %99 : vector<4x128xf32>
    %c14 = arith.constant 14 : index
    %c0_104 = arith.constant 0 : index
    %c0_105 = arith.constant 0 : index
    %101 = vector.load %arg1[%c14, %c0_104, %c0_105] : memref<16x4x12xbf16, #tpu.memory_space<vmem>>, vector<1x4x12xbf16>
    %102 = vector.shape_cast %101 : vector<1x4x12xbf16> to vector<4x12xbf16>
    %c2_106 = arith.constant 2 : index
    %c0_107 = arith.constant 0 : index
    %c0_108 = arith.constant 0 : index
    %103 = vector.load %arg2[%c2_106, %c0_107, %c0_108] : memref<4x12x128xbf16, #tpu.memory_space<vmem>>, vector<1x12x128xbf16>
    %104 = vector.shape_cast %103 : vector<1x12x128xbf16> to vector<12x128xbf16>
    %cst_109 = arith.constant dense<0.000000e+00> : vector<4x128xf32>
    %105 = tpu.matmul %102, %104, %cst_109 {dimension_numbers = #tpu.dot_dimension_numbers<[1], [0], [0], [1], [0, 0, 1, 1], [], []>} : vector<4x12xbf16>, vector<12x128xbf16>, vector<4x128xf32> -> vector<4x128xf32>
    %106 = arith.addf %100, %105 : vector<4x128xf32>
    %c15 = arith.constant 15 : index
    %c0_110 = arith.constant 0 : index
    %c0_111 = arith.constant 0 : index
    %107 = vector.load %arg1[%c15, %c0_110, %c0_111] : memref<16x4x12xbf16, #tpu.memory_space<vmem>>, vector<1x4x12xbf16>
    %108 = vector.shape_cast %107 : vector<1x4x12xbf16> to vector<4x12xbf16>
    %c3_112 = arith.constant 3 : index
    %c0_113 = arith.constant 0 : index
    %c0_114 = arith.constant 0 : index
    %109 = vector.load %arg2[%c3_112, %c0_113, %c0_114] : memref<4x12x128xbf16, #tpu.memory_space<vmem>>, vector<1x12x128xbf16>
    %110 = vector.shape_cast %109 : vector<1x12x128xbf16> to vector<12x128xbf16>
    %cst_115 = arith.constant dense<0.000000e+00> : vector<4x128xf32>
    %111 = tpu.matmul %108, %110, %cst_115 {dimension_numbers = #tpu.dot_dimension_numbers<[1], [0], [0], [1], [0, 0, 1, 1], [], []>} : vector<4x12xbf16>, vector<12x128xbf16>, vector<4x128xf32> -> vector<4x128xf32>
    %112 = arith.addf %106, %111 : vector<4x128xf32>
    %c3_116 = arith.constant 3 : index
    %c0_117 = arith.constant 0 : index
    %c0_118 = arith.constant 0 : index
    %113 = vector.load %arg4[%c3_116, %c0_117, %c0_118] : memref<4x4x128xf32, #tpu.memory_space<vmem>>, vector<1x4x128xf32>
    %114 = vector.shape_cast %113 : vector<1x4x128xf32> to vector<4x128xf32>
    %115 = vector.shape_cast %112 : vector<4x128xf32> to vector<1x4x128xf32>
    tpu.vector_store %arg4[%c3_116, %c0_117, %c0_118], %115 {strides = array<i32>} : memref<4x4x128xf32, #tpu.memory_space<vmem>>, vector<1x4x128xf32>,
    return
  }
  func.func @transform_0(%arg0: i32) -> (i32, i32, i32) {
    %c0_i32 = arith.constant 0 : i32
    %c0_i32_0 = arith.constant 0 : i32
    %c0_i32_1 = arith.constant 0 : i32
    return %arg0, %c0_i32, %c0_i32_0 : i32, i32, i32
  }
  func.func @transform_1(%arg0: i32) -> (i32, i32, i32) {
    %c0_i32 = arith.constant 0 : i32
    %c0_i32_0 = arith.constant 0 : i32
    %c0_i32_1 = arith.constant 0 : i32
    %c0_i32_2 = arith.constant 0 : i32
    return %c0_i32, %c0_i32_0, %c0_i32_1 : i32, i32, i32
  }
  func.func @transform_2(%arg0: i32) -> (i32, i32, i32) {
    %c1_i32 = arith.constant 1 : i32
    %c0_i32 = arith.constant 0 : i32
    %0 = arith.cmpi eq, %c1_i32, %c0_i32 : i32
    %c1_i32_0 = arith.constant 1 : i32
    %1 = arith.select %0, %c1_i32_0, %c1_i32 : i32
    %2 = arith.remsi %arg0, %1 : i32
    %c0_i32_1 = arith.constant 0 : i32
    %3 = arith.cmpi ne, %2, %c0_i32_1 : i32
    %c0_i32_2 = arith.constant 0 : i32
    %4 = arith.cmpi slt, %2, %c0_i32_2 : i32
    %c0_i32_3 = arith.constant 0 : i32
    %5 = arith.cmpi slt, %1, %c0_i32_3 : i32
    %6 = arith.xori %4, %5 : i1
    %7 = arith.andi %6, %3 : i1
    %8 = arith.addi %2, %1 : i32
    %9 = arith.select %7, %8, %2 : i32
    %c0_i32_4 = arith.constant 0 : i32
    %c0_i32_5 = arith.constant 0 : i32
    %c0_i32_6 = arith.constant 0 : i32
    return %9, %c0_i32_4, %c0_i32_5 : i32, i32, i32
  }
  func.func @transform_3(%arg0: i32) -> (i32, i32, i32) {
    %c0_i32 = arith.constant 0 : i32
    %c0_i32_0 = arith.constant 0 : i32
    %c0_i32_1 = arith.constant 0 : i32
    return %arg0, %c0_i32, %c0_i32_0 : i32, i32, i32
  }
}

module attributes {stable_mosaic.version = 11 : i64} {
  func.func @_patch_embed_kernel(%arg0: i32, %arg1: memref<16x4x12xbf16, #tpu.memory_space<vmem>>, %arg2: memref<4x12x128xbf16, #tpu.memory_space<vmem>>, %arg3: memref<4x4x128xf32, #tpu.memory_space<vmem>>, %arg4: memref<4x4x128xf32, #tpu.memory_space<vmem>>) attributes {dimension_semantics = [#tpu.dimension_semantics<parallel>], iteration_bounds = array<i64: 2>, scalar_prefetch = 0 : i64, scratch_operands = 0 : i64, tpu.core_type = #tpu.core_type<tc>, window_params = [{transform_indices = @transform_0, window_bounds = array<i64: 16, 4, 12>}, {pipeline_mode = #tpu.pipeline_mode<synchronous>, transform_indices = @transform_1, window_bounds = array<i64: 4, 12, 128>}, {transform_indices = @transform_2, window_bounds = array<i64: 4, 4, 128>}, {transform_indices = @transform_3, window_bounds = array<i64: 4, 4, 128>}]} {
    %c0 = arith.constant 0 : index
    %c0_0 = arith.constant 0 : index
    %c0_1 = arith.constant 0 : index
    %0 = vector.load %arg3[%c0, %c0_0, %c0_1] : memref<4x4x128xf32, #tpu.memory_space<vmem>>, vector<1x4x128xf32>
    %1 = vector.shape_cast %0 : vector<1x4x128xf32> to vector<4x128xf32>
    %c0_2 = arith.constant 0 : index
    %c0_3 = arith.constant 0 : index
    %c0_4 = arith.constant 0 : index
    %2 = vector.load %arg1[%c0_2, %c0_3, %c0_4] : memref<16x4x12xbf16, #tpu.memory_space<vmem>>, vector<1x4x12xbf16>
    %3 = vector.shape_cast %2 : vector<1x4x12xbf16> to vector<4x12xbf16>
    %c0_5 = arith.constant 0 : index
    %c0_6 = arith.constant 0 : index
    %c0_7 = arith.constant 0 : index
    %4 = vector.load %arg2[%c0_5, %c0_6, %c0_7] : memref<4x12x128xbf16, #tpu.memory_space<vmem>>, vector<1x12x128xbf16>
    %5 = vector.shape_cast %4 : vector<1x12x128xbf16> to vector<12x128xbf16>
    %cst = arith.constant dense<0.000000e+00> : vector<4x128xf32>
    %6 = tpu.matmul %3, %5, %cst {dimension_numbers = #tpu.dot_dimension_numbers<[1], [0], [0], [1], [0, 0, 1, 1], [], []>} : vector<4x12xbf16>, vector<12x128xbf16>, vector<4x128xf32> -> vector<4x128xf32>
    %7 = arith.addf %1, %6 : vector<4x128xf32>
    %c1 = arith.constant 1 : index
    %c0_8 = arith.constant 0 : index
    %c0_9 = arith.constant 0 : index
    %8 = vector.load %arg1[%c1, %c0_8, %c0_9] : memref<16x4x12xbf16, #tpu.memory_space<vmem>>, vector<1x4x12xbf16>
    %9 = vector.shape_cast %8 : vector<1x4x12xbf16> to vector<4x12xbf16>
    %c1_10 = arith.constant 1 : index
    %c0_11 = arith.constant 0 : index
    %c0_12 = arith.constant 0 : index
    %10 = vector.load %arg2[%c1_10, %c0_11, %c0_12] : memref<4x12x128xbf16, #tpu.memory_space<vmem>>, vector<1x12x128xbf16>
    %11 = vector.shape_cast %10 : vector<1x12x128xbf16> to vector<12x128xbf16>
    %cst_13 = arith.constant dense<0.000000e+00> : vector<4x128xf32>
    %12 = tpu.matmul %9, %11, %cst_13 {dimension_numbers = #tpu.dot_dimension_numbers<[1], [0], [0], [1], [0, 0, 1, 1], [], []>} : vector<4x12xbf16>, vector<12x128xbf16>, vector<4x128xf32> -> vector<4x128xf32>
    %13 = arith.addf %7, %12 : vector<4x128xf32>
    %c2 = arith.constant 2 : index
    %c0_14 = arith.constant 0 : index
    %c0_15 = arith.constant 0 : index
    %14 = vector.load %arg1[%c2, %c0_14, %c0_15] : memref<16x4x12xbf16, #tpu.memory_space<vmem>>, vector<1x4x12xbf16>
    %15 = vector.shape_cast %14 : vector<1x4x12xbf16> to vector<4x12xbf16>
    %c2_16 = arith.constant 2 : index
    %c0_17 = arith.constant 0 : index
    %c0_18 = arith.constant 0 : index
    %16 = vector.load %arg2[%c2_16, %c0_17, %c0_18] : memref<4x12x128xbf16, #tpu.memory_space<vmem>>, vector<1x12x128xbf16>
    %17 = vector.shape_cast %16 : vector<1x12x128xbf16> to vector<12x128xbf16>
    %cst_19 = arith.constant dense<0.000000e+00> : vector<4x128xf32>
    %18 = tpu.matmul %15, %17, %cst_19 {dimension_numbers = #tpu.dot_dimension_numbers<[1], [0], [0], [1], [0, 0, 1, 1], [], []>} : vector<4x12xbf16>, vector<12x128xbf16>, vector<4x128xf32> -> vector<4x128xf32>
    %19 = arith.addf %13, %18 : vector<4x128xf32>
    %c3 = arith.constant 3 : index
    %c0_20 = arith.constant 0 : index
    %c0_21 = arith.constant 0 : index
    %20 = vector.load %arg1[%c3, %c0_20, %c0_21] : memref<16x4x12xbf16, #tpu.memory_space<vmem>>, vector<1x4x12xbf16>
    %21 = vector.shape_cast %20 : vector<1x4x12xbf16> to vector<4x12xbf16>
    %c3_22 = arith.constant 3 : index
    %c0_23 = arith.constant 0 : index
    %c0_24 = arith.constant 0 : index
    %22 = vector.load %arg2[%c3_22, %c0_23, %c0_24] : memref<4x12x128xbf16, #tpu.memory_space<vmem>>, vector<1x12x128xbf16>
    %23 = vector.shape_cast %22 : vector<1x12x128xbf16> to vector<12x128xbf16>
    %cst_25 = arith.constant dense<0.000000e+00> : vector<4x128xf32>
    %24 = tpu.matmul %21, %23, %cst_25 {dimension_numbers = #tpu.dot_dimension_numbers<[1], [0], [0], [1], [0, 0, 1, 1], [], []>} : vector<4x12xbf16>, vector<12x128xbf16>, vector<4x128xf32> -> vector<4x128xf32>
    %25 = arith.addf %19, %24 : vector<4x128xf32>
    %c0_26 = arith.constant 0 : index
    %c0_27 = arith.constant 0 : index
    %c0_28 = arith.constant 0 : index
    %26 = vector.load %arg4[%c0_26, %c0_27, %c0_28] : memref<4x4x128xf32, #tpu.memory_space<vmem>>, vector<1x4x128xf32>
    %27 = vector.shape_cast %26 : vector<1x4x128xf32> to vector<4x128xf32>
    %28 = vector.shape_cast %25 : vector<4x128xf32> to vector<1x4x128xf32>
    tpu.vector_store %arg4[%c0_26, %c0_27, %c0_28], %28 {strides = array<i32>} : memref<4x4x128xf32, #tpu.memory_space<vmem>>, vector<1x4x128xf32>,
    %c1_29 = arith.constant 1 : index
    %c0_30 = arith.constant 0 : index
    %c0_31 = arith.constant 0 : index
    %29 = vector.load %arg3[%c1_29, %c0_30, %c0_31] : memref<4x4x128xf32, #tpu.memory_space<vmem>>, vector<1x4x128xf32>
    %30 = vector.shape_cast %29 : vector<1x4x128xf32> to vector<4x128xf32>
    %c4 = arith.constant 4 : index
    %c0_32 = arith.constant 0 : index
    %c0_33 = arith.constant 0 : index
    %31 = vector.load %arg1[%c4, %c0_32, %c0_33] : memref<16x4x12xbf16, #tpu.memory_space<vmem>>, vector<1x4x12xbf16>
    %32 = vector.shape_cast %31 : vector<1x4x12xbf16> to vector<4x12xbf16>
    %c0_34 = arith.constant 0 : index
    %c0_35 = arith.constant 0 : index
    %c0_36 = arith.constant 0 : index
    %33 = vector.load %arg2[%c0_34, %c0_35, %c0_36] : memref<4x12x128xbf16, #tpu.memory_space<vmem>>, vector<1x12x128xbf16>
    %34 = vector.shape_cast %33 : vector<1x12x128xbf16> to vector<12x128xbf16>
    %cst_37 = arith.constant dense<0.000000e+00> : vector<4x128xf32>
    %35 = tpu.matmul %32, %34, %cst_37 {dimension_numbers = #tpu.dot_dimension_numbers<[1], [0], [0], [1], [0, 0, 1, 1], [], []>} : vector<4x12xbf16>, vector<12x128xbf16>, vector<4x128xf32> -> vector<4x128xf32>
    %36 = arith.addf %30, %35 : vector<4x128xf32>
    %c5 = arith.constant 5 : index
    %c0_38 = arith.constant 0 : index
    %c0_39 = arith.constant 0 : index
    %37 = vector.load %arg1[%c5, %c0_38, %c0_39] : memref<16x4x12xbf16, #tpu.memory_space<vmem>>, vector<1x4x12xbf16>
    %38 = vector.shape_cast %37 : vector<1x4x12xbf16> to vector<4x12xbf16>
    %c1_40 = arith.constant 1 : index
    %c0_41 = arith.constant 0 : index
    %c0_42 = arith.constant 0 : index
    %39 = vector.load %arg2[%c1_40, %c0_41, %c0_42] : memref<4x12x128xbf16, #tpu.memory_space<vmem>>, vector<1x12x128xbf16>
    %40 = vector.shape_cast %39 : vector<1x12x128xbf16> to vector<12x128xbf16>
    %cst_43 = arith.constant dense<0.000000e+00> : vector<4x128xf32>
    %41 = tpu.matmul %38, %40, %cst_43 {dimension_numbers = #tpu.dot_dimension_numbers<[1], [0], [0], [1], [0, 0, 1, 1], [], []>} : vector<4x12xbf16>, vector<12x128xbf16>, vector<4x128xf32> -> vector<4x128xf32>
    %42 = arith.addf %36, %41 : vector<4x128xf32>
    %c6 = arith.constant 6 : index
    %c0_44 = arith.constant 0 : index
    %c0_45 = arith.constant 0 : index
    %43 = vector.load %arg1[%c6, %c0_44, %c0_45] : memref<16x4x12xbf16, #tpu.memory_space<vmem>>, vector<1x4x12xbf16>
    %44 = vector.shape_cast %43 : vector<1x4x12xbf16> to vector<4x12xbf16>
    %c2_46 = arith.constant 2 : index
    %c0_47 = arith.constant 0 : index
    %c0_48 = arith.constant 0 : index
    %45 = vector.load %arg2[%c2_46, %c0_47, %c0_48] : memref<4x12x128xbf16, #tpu.memory_space<vmem>>, vector<1x12x128xbf16>
    %46 = vector.shape_cast %45 : vector<1x12x128xbf16> to vector<12x128xbf16>
    %cst_49 = arith.constant dense<0.000000e+00> : vector<4x128xf32>
    %47 = tpu.matmul %44, %46, %cst_49 {dimension_numbers = #tpu.dot_dimension_numbers<[1], [0], [0], [1], [0, 0, 1, 1], [], []>} : vector<4x12xbf16>, vector<12x128xbf16>, vector<4x128xf32> -> vector<4x128xf32>
    %48 = arith.addf %42, %47 : vector<4x128xf32>
    %c7 = arith.constant 7 : index
    %c0_50 = arith.constant 0 : index
    %c0_51 = arith.constant 0 : index
    %49 = vector.load %arg1[%c7, %c0_50, %c0_51] : memref<16x4x12xbf16, #tpu.memory_space<vmem>>, vector<1x4x12xbf16>
    %50 = vector.shape_cast %49 : vector<1x4x12xbf16> to vector<4x12xbf16>
    %c3_52 = arith.constant 3 : index
    %c0_53 = arith.constant 0 : index
    %c0_54 = arith.constant 0 : index
    %51 = vector.load %arg2[%c3_52, %c0_53, %c0_54] : memref<4x12x128xbf16, #tpu.memory_space<vmem>>, vector<1x12x128xbf16>
    %52 = vector.shape_cast %51 : vector<1x12x128xbf16> to vector<12x128xbf16>
    %cst_55 = arith.constant dense<0.000000e+00> : vector<4x128xf32>
    %53 = tpu.matmul %50, %52, %cst_55 {dimension_numbers = #tpu.dot_dimension_numbers<[1], [0], [0], [1], [0, 0, 1, 1], [], []>} : vector<4x12xbf16>, vector<12x128xbf16>, vector<4x128xf32> -> vector<4x128xf32>
    %54 = arith.addf %48, %53 : vector<4x128xf32>
    %c1_56 = arith.constant 1 : index
    %c0_57 = arith.constant 0 : index
    %c0_58 = arith.constant 0 : index
    %55 = vector.load %arg4[%c1_56, %c0_57, %c0_58] : memref<4x4x128xf32, #tpu.memory_space<vmem>>, vector<1x4x128xf32>
    %56 = vector.shape_cast %55 : vector<1x4x128xf32> to vector<4x128xf32>
    %57 = vector.shape_cast %54 : vector<4x128xf32> to vector<1x4x128xf32>
    tpu.vector_store %arg4[%c1_56, %c0_57, %c0_58], %57 {strides = array<i32>} : memref<4x4x128xf32, #tpu.memory_space<vmem>>, vector<1x4x128xf32>,
    %c2_59 = arith.constant 2 : index
    %c0_60 = arith.constant 0 : index
    %c0_61 = arith.constant 0 : index
    %58 = vector.load %arg3[%c2_59, %c0_60, %c0_61] : memref<4x4x128xf32, #tpu.memory_space<vmem>>, vector<1x4x128xf32>
    %59 = vector.shape_cast %58 : vector<1x4x128xf32> to vector<4x128xf32>
    %c8 = arith.constant 8 : index
    %c0_62 = arith.constant 0 : index
    %c0_63 = arith.constant 0 : index
    %60 = vector.load %arg1[%c8, %c0_62, %c0_63] : memref<16x4x12xbf16, #tpu.memory_space<vmem>>, vector<1x4x12xbf16>
    %61 = vector.shape_cast %60 : vector<1x4x12xbf16> to vector<4x12xbf16>
    %c0_64 = arith.constant 0 : index
    %c0_65 = arith.constant 0 : index
    %c0_66 = arith.constant 0 : index
    %62 = vector.load %arg2[%c0_64, %c0_65, %c0_66] : memref<4x12x128xbf16, #tpu.memory_space<vmem>>, vector<1x12x128xbf16>
    %63 = vector.shape_cast %62 : vector<1x12x128xbf16> to vector<12x128xbf16>
    %cst_67 = arith.constant dense<0.000000e+00> : vector<4x128xf32>
    %64 = tpu.matmul %61, %63, %cst_67 {dimension_numbers = #tpu.dot_dimension_numbers<[1], [0], [0], [1], [0, 0, 1, 1], [], []>} : vector<4x12xbf16>, vector<12x128xbf16>, vector<4x128xf32> -> vector<4x128xf32>
    %65 = arith.addf %59, %64 : vector<4x128xf32>
    %c9 = arith.constant 9 : index
    %c0_68 = arith.constant 0 : index
    %c0_69 = arith.constant 0 : index
    %66 = vector.load %arg1[%c9, %c0_68, %c0_69] : memref<16x4x12xbf16, #tpu.memory_space<vmem>>, vector<1x4x12xbf16>
    %67 = vector.shape_cast %66 : vector<1x4x12xbf16> to vector<4x12xbf16>
    %c1_70 = arith.constant 1 : index
    %c0_71 = arith.constant 0 : index
    %c0_72 = arith.constant 0 : index
    %68 = vector.load %arg2[%c1_70, %c0_71, %c0_72] : memref<4x12x128xbf16, #tpu.memory_space<vmem>>, vector<1x12x128xbf16>
    %69 = vector.shape_cast %68 : vector<1x12x128xbf16> to vector<12x128xbf16>
    %cst_73 = arith.constant dense<0.000000e+00> : vector<4x128xf32>
    %70 = tpu.matmul %67, %69, %cst_73 {dimension_numbers = #tpu.dot_dimension_numbers<[1], [0], [0], [1], [0, 0, 1, 1], [], []>} : vector<4x12xbf16>, vector<12x128xbf16>, vector<4x128xf32> -> vector<4x128xf32>
    %71 = arith.addf %65, %70 : vector<4x128xf32>
    %c10 = arith.constant 10 : index
    %c0_74 = arith.constant 0 : index
    %c0_75 = arith.constant 0 : index
    %72 = vector.load %arg1[%c10, %c0_74, %c0_75] : memref<16x4x12xbf16, #tpu.memory_space<vmem>>, vector<1x4x12xbf16>
    %73 = vector.shape_cast %72 : vector<1x4x12xbf16> to vector<4x12xbf16>
    %c2_76 = arith.constant 2 : index
    %c0_77 = arith.constant 0 : index
    %c0_78 = arith.constant 0 : index
    %74 = vector.load %arg2[%c2_76, %c0_77, %c0_78] : memref<4x12x128xbf16, #tpu.memory_space<vmem>>, vector<1x12x128xbf16>
    %75 = vector.shape_cast %74 : vector<1x12x128xbf16> to vector<12x128xbf16>
    %cst_79 = arith.constant dense<0.000000e+00> : vector<4x128xf32>
    %76 = tpu.matmul %73, %75, %cst_79 {dimension_numbers = #tpu.dot_dimension_numbers<[1], [0], [0], [1], [0, 0, 1, 1], [], []>} : vector<4x12xbf16>, vector<12x128xbf16>, vector<4x128xf32> -> vector<4x128xf32>
    %77 = arith.addf %71, %76 : vector<4x128xf32>
    %c11 = arith.constant 11 : index
    %c0_80 = arith.constant 0 : index
    %c0_81 = arith.constant 0 : index
    %78 = vector.load %arg1[%c11, %c0_80, %c0_81] : memref<16x4x12xbf16, #tpu.memory_space<vmem>>, vector<1x4x12xbf16>
    %79 = vector.shape_cast %78 : vector<1x4x12xbf16> to vector<4x12xbf16>
    %c3_82 = arith.constant 3 : index
    %c0_83 = arith.constant 0 : index
    %c0_84 = arith.constant 0 : index
    %80 = vector.load %arg2[%c3_82, %c0_83, %c0_84] : memref<4x12x128xbf16, #tpu.memory_space<vmem>>, vector<1x12x128xbf16>
    %81 = vector.shape_cast %80 : vector<1x12x128xbf16> to vector<12x128xbf16>
    %cst_85 = arith.constant dense<0.000000e+00> : vector<4x128xf32>
    %82 = tpu.matmul %79, %81, %cst_85 {dimension_numbers = #tpu.dot_dimension_numbers<[1], [0], [0], [1], [0, 0, 1, 1], [], []>} : vector<4x12xbf16>, vector<12x128xbf16>, vector<4x128xf32> -> vector<4x128xf32>
    %83 = arith.addf %77, %82 : vector<4x128xf32>
    %c2_86 = arith.constant 2 : index
    %c0_87 = arith.constant 0 : index
    %c0_88 = arith.constant 0 : index
    %84 = vector.load %arg4[%c2_86, %c0_87, %c0_88] : memref<4x4x128xf32, #tpu.memory_space<vmem>>, vector<1x4x128xf32>
    %85 = vector.shape_cast %84 : vector<1x4x128xf32> to vector<4x128xf32>
    %86 = vector.shape_cast %83 : vector<4x128xf32> to vector<1x4x128xf32>
    tpu.vector_store %arg4[%c2_86, %c0_87, %c0_88], %86 {strides = array<i32>} : memref<4x4x128xf32, #tpu.memory_space<vmem>>, vector<1x4x128xf32>,
    %c3_89 = arith.constant 3 : index
    %c0_90 = arith.constant 0 : index
    %c0_91 = arith.constant 0 : index
    %87 = vector.load %arg3[%c3_89, %c0_90, %c0_91] : memref<4x4x128xf32, #tpu.memory_space<vmem>>, vector<1x4x128xf32>
    %88 = vector.shape_cast %87 : vector<1x4x128xf32> to vector<4x128xf32>
    %c12 = arith.constant 12 : index
    %c0_92 = arith.constant 0 : index
    %c0_93 = arith.constant 0 : index
    %89 = vector.load %arg1[%c12, %c0_92, %c0_93] : memref<16x4x12xbf16, #tpu.memory_space<vmem>>, vector<1x4x12xbf16>
    %90 = vector.shape_cast %89 : vector<1x4x12xbf16> to vector<4x12xbf16>
    %c0_94 = arith.constant 0 : index
    %c0_95 = arith.constant 0 : index
    %c0_96 = arith.constant 0 : index
    %91 = vector.load %arg2[%c0_94, %c0_95, %c0_96] : memref<4x12x128xbf16, #tpu.memory_space<vmem>>, vector<1x12x128xbf16>
    %92 = vector.shape_cast %91 : vector<1x12x128xbf16> to vector<12x128xbf16>
    %cst_97 = arith.constant dense<0.000000e+00> : vector<4x128xf32>
    %93 = tpu.matmul %90, %92, %cst_97 {dimension_numbers = #tpu.dot_dimension_numbers<[1], [0], [0], [1], [0, 0, 1, 1], [], []>} : vector<4x12xbf16>, vector<12x128xbf16>, vector<4x128xf32> -> vector<4x128xf32>
    %94 = arith.addf %88, %93 : vector<4x128xf32>
    %c13 = arith.constant 13 : index
    %c0_98 = arith.constant 0 : index
    %c0_99 = arith.constant 0 : index
    %95 = vector.load %arg1[%c13, %c0_98, %c0_99] : memref<16x4x12xbf16, #tpu.memory_space<vmem>>, vector<1x4x12xbf16>
    %96 = vector.shape_cast %95 : vector<1x4x12xbf16> to vector<4x12xbf16>
    %c1_100 = arith.constant 1 : index
    %c0_101 = arith.constant 0 : index
    %c0_102 = arith.constant 0 : index
    %97 = vector.load %arg2[%c1_100, %c0_101, %c0_102] : memref<4x12x128xbf16, #tpu.memory_space<vmem>>, vector<1x12x128xbf16>
    %98 = vector.shape_cast %97 : vector<1x12x128xbf16> to vector<12x128xbf16>
    %cst_103 = arith.constant dense<0.000000e+00> : vector<4x128xf32>
    %99 = tpu.matmul %96, %98, %cst_103 {dimension_numbers = #tpu.dot_dimension_numbers<[1], [0], [0], [1], [0, 0, 1, 1], [], []>} : vector<4x12xbf16>, vector<12x128xbf16>, vector<4x128xf32> -> vector<4x128xf32>
    %100 = arith.addf %94, %99 : vector<4x128xf32>
    %c14 = arith.constant 14 : index
    %c0_104 = arith.constant 0 : index
    %c0_105 = arith.constant 0 : index
    %101 = vector.load %arg1[%c14, %c0_104, %c0_105] : memref<16x4x12xbf16, #tpu.memory_space<vmem>>, vector<1x4x12xbf16>
    %102 = vector.shape_cast %101 : vector<1x4x12xbf16> to vector<4x12xbf16>
    %c2_106 = arith.constant 2 : index
    %c0_107 = arith.constant 0 : index
    %c0_108 = arith.constant 0 : index
    %103 = vector.load %arg2[%c2_106, %c0_107, %c0_108] : memref<4x12x128xbf16, #tpu.memory_space<vmem>>, vector<1x12x128xbf16>
    %104 = vector.shape_cast %103 : vector<1x12x128xbf16> to vector<12x128xbf16>
    %cst_109 = arith.constant dense<0.000000e+00> : vector<4x128xf32>
    %105 = tpu.matmul %102, %104, %cst_109 {dimension_numbers = #tpu.dot_dimension_numbers<[1], [0], [0], [1], [0, 0, 1, 1], [], []>} : vector<4x12xbf16>, vector<12x128xbf16>, vector<4x128xf32> -> vector<4x128xf32>
    %106 = arith.addf %100, %105 : vector<4x128xf32>
    %c15 = arith.constant 15 : index
    %c0_110 = arith.constant 0 : index
    %c0_111 = arith.constant 0 : index
    %107 = vector.load %arg1[%c15, %c0_110, %c0_111] : memref<16x4x12xbf16, #tpu.memory_space<vmem>>, vector<1x4x12xbf16>
    %108 = vector.shape_cast %107 : vector<1x4x12xbf16> to vector<4x12xbf16>
    %c3_112 = arith.constant 3 : index
    %c0_113 = arith.constant 0 : index
    %c0_114 = arith.constant 0 : index
    %109 = vector.load %arg2[%c3_112, %c0_113, %c0_114] : memref<4x12x128xbf16, #tpu.memory_space<vmem>>, vector<1x12x128xbf16>
    %110 = vector.shape_cast %109 : vector<1x12x128xbf16> to vector<12x128xbf16>
    %cst_115 = arith.constant dense<0.000000e+00> : vector<4x128xf32>
    %111 = tpu.matmul %108, %110, %cst_115 {dimension_numbers = #tpu.dot_dimension_numbers<[1], [0], [0], [1], [0, 0, 1, 1], [], []>} : vector<4x12xbf16>, vector<12x128xbf16>, vector<4x128xf32> -> vector<4x128xf32>
    %112 = arith.addf %106, %111 : vector<4x128xf32>
    %c3_116 = arith.constant 3 : index
    %c0_117 = arith.constant 0 : index
    %c0_118 = arith.constant 0 : index
    %113 = vector.load %arg4[%c3_116, %c0_117, %c0_118] : memref<4x4x128xf32, #tpu.memory_space<vmem>>, vector<1x4x128xf32>
    %114 = vector.shape_cast %113 : vector<1x4x128xf32> to vector<4x128xf32>
    %115 = vector.shape_cast %112 : vector<4x128xf32> to vector<1x4x128xf32>
    tpu.vector_store %arg4[%c3_116, %c0_117, %c0_118], %115 {strides = array<i32>} : memref<4x4x128xf32, #tpu.memory_space<vmem>>, vector<1x4x128xf32>,
    return
  }
  func.func @transform_0(%arg0: i32) -> (i32, i32, i32) {
    %c0_i32 = arith.constant 0 : i32
    %c0_i32_0 = arith.constant 0 : i32
    %c0_i32_1 = arith.constant 0 : i32
    return %arg0, %c0_i32, %c0_i32_0 : i32, i32, i32
  }
  func.func @transform_1(%arg0: i32) -> (i32, i32, i32) {
    %c0_i32 = arith.constant 0 : i32
    %c0_i32_0 = arith.constant 0 : i32
    %c0_i32_1 = arith.constant 0 : i32
    %c0_i32_2 = arith.constant 0 : i32
    return %c0_i32, %c0_i32_0, %c0_i32_1 : i32, i32, i32
  }
  func.func @transform_2(%arg0: i32) -> (i32, i32, i32) {
    %c1_i32 = arith.constant 1 : i32
    %c0_i32 = arith.constant 0 : i32
    %0 = arith.cmpi eq, %c1_i32, %c0_i32 : i32
    %c1_i32_0 = arith.constant 1 : i32
    %1 = arith.select %0, %c1_i32_0, %c1_i32 : i32
    %2 = arith.remsi %arg0, %1 : i32
    %c0_i32_1 = arith.constant 0 : i32
    %3 = arith.cmpi ne, %2, %c0_i32_1 : i32
    %c0_i32_2 = arith.constant 0 : i32
    %4 = arith.cmpi slt, %2, %c0_i32_2 : i32
    %c0_i32_3 = arith.constant 0 : i32
    %5 = arith.cmpi slt, %1, %c0_i32_3 : i32
    %6 = arith.xori %4, %5 : i1
    %7 = arith.andi %6, %3 : i1
    %8 = arith.addi %2, %1 : i32
    %9 = arith.select %7, %8, %2 : i32
    %c0_i32_4 = arith.constant 0 : i32
    %c0_i32_5 = arith.constant 0 : i32
    %c0_i32_6 = arith.constant 0 : i32
    return %9, %c0_i32_4, %c0_i32_5 : i32, i32, i32
  }
  func.func @transform_3(%arg0: i32) -> (i32, i32, i32) {
    %c0_i32 = arith.constant 0 : i32
    %c0_i32_0 = arith.constant 0 : i32
    %c0_i32_1 = arith.constant 0 : i32
    return %arg0, %c0_i32, %c0_i32_0 : i32, i32, i32
  }
}

</mosaic_0001>

<llo_original>
// kernel: tpu_custom_call.1
$region0: #{tpu_custom_call.1}
  #allocation0 [shape = 'u32[]', space=smem, size = 0x4, offset = 0x4, fixed_abs, tag = 'smem constant byte address 0x4 - core index']
  #allocation1 [shape = 'u32[144,128]{1,0:T(1,128)}', space=vmem, size = 0x12000, scoped, tag = 'internal scratch']
  %s0 = inlined_call_operand.vmem [shape: bf16[32,4,12], index: 0, kind: input, shape index: {}]
  %s1 = inlined_call_operand.vmem [shape: bf16[4,12,128], index: 1, kind: input, shape index: {}]
  %s2 = inlined_call_operand.vmem [shape: f32[4,4,128], index: 2, kind: input, shape index: {}]
  %s3 = inlined_call_operand.hbm [shape: f32[8,4,128], index: 3, kind: output, shape index: {}]
  %s4 = sld [smem:[#allocation0]]
  $region45: #{tpu_custom_call.1} parent=0
    _
  %s6 = ssub.s32 1, %s4
  %s7 = scalar_select 0, %s6, %s4
  $region1: #{tpu_custom_call.1} parent=0
    #allocation2 [shape = 'u8[16384]{0}', space=vmem, size = 0x4000, scoped, tag = 'output window, operand 0']
    #allocation3 [shape = 's32[2]{0}', space=sflag, size = 0x8, scoped, tag = 'scoped memory for tpu_custom_call.1']
    %8 = vsyncpa [#allocation3], 0
    %s9 = scalar_lea.sflag [#allocation3], 1
    %10 = vsyncpa %s9, 0
    loop: start=0, step=1, limit=4
    $region2: #{tpu_custom_call.1} parent=1 // loop_pre_header
      _
    $region3: #{tpu_custom_call.1} parent=1 // loop_header
      %s12 = sphi 0, %s16
      %p13 = scmp.ge.s32.totalorder %s12, 4
      %s22 = sphi 0, %s24
      %s25 = sphi 0, %s22
      %s26 = sphi 0, %s25
      %s42 = sphi 0, %s26
      %s46 = sphi 0, %s46
      %s48 = sphi 0, %s46
      %s49 = sphi 0, %s48
      %s63 = sphi 0, %s49
      %s67 = sphi 0, %s67
      %s69 = sphi 0, %s67
      %s70 = sphi 0, %s69
      %s84 = sphi 0, %s70
      %s90 = sphi 0, %s92
      %s93 = sphi 0, %s90
      %s94 = sphi 0, %s93
      %s110 = sphi 0, %s94
    $region4: #{tpu_custom_call.1} parent=1 // loop_header_branch
      %15 = sbr.rel (%p13) target = $region8
    $region5: #{tpu_custom_call.1} parent=1 // loop_body
      %s17 = ssub.s32 %s12, 1
      %s18 = ssub.s32 %s12, 2
      %s19 = sadd.s32 %s12, 1
      %s20 = ssub.s32 %s12, %s19
      %p21 = scmp.eq.s32.totalorder %s20, 0
      %s23 = sadd.s32 %s22, 1
      %s24 = scalar_select %p21, %s22, %s23
      %p27 = pneg %p21
      %p28 = scmp.eq.s32.totalorder %s12, 1
      %p29 = por %p27, %p28
      %p30 = scmp.ne.s32.totalorder %s22, %s25
      %p31 = scmp.eq.s32.totalorder %s12, 0
      %p32 = por %p30, %p31
      %p33 = scmp.ne.s32.totalorder %s22, %s25
      %p34 = scmp.eq.s32.totalorder %s17, 1
      %p35 = por %p33, %p34
      %p36 = scmp.ne.s32.totalorder %s25, %s26
      %p37 = scmp.eq.s32.totalorder %s17, 0
      %p38 = por %p36, %p37
      %p39 = scmp.ne.s32.totalorder %s25, %s26
      %p40 = scmp.eq.s32.totalorder %s18, 1
      %p41 = por %p39, %p40
      %p43 = scmp.ne.s32.totalorder %s26, %s42
      %p44 = scmp.eq.s32.totalorder %s18, 0
      %p45 = por %p43, %p44
      %s47 = sadd.s32 %s46, 1
      %p50 = scmp.eq.s32.totalorder %s12, 1
      %p51 = scmp.ne.s32.totalorder %s46, %s48
      %p52 = scmp.eq.s32.totalorder %s12, 0
      %p53 = por %p51, %p52
      %p54 = scmp.ne.s32.totalorder %s46, %s48
      %p55 = scmp.eq.s32.totalorder %s17, 1
      %p56 = por %p54, %p55
      %p57 = scmp.ne.s32.totalorder %s48, %s49
      %p58 = scmp.eq.s32.totalorder %s17, 0
      %p59 = por %p57, %p58
      %p60 = scmp.ne.s32.totalorder %s48, %s49
      %p61 = scmp.eq.s32.totalorder %s18, 1
      %p62 = por %p60, %p61
      %p64 = scmp.ne.s32.totalorder %s49, %s63
      %p65 = scmp.eq.s32.totalorder %s18, 0
      %p66 = por %p64, %p65
      %s68 = sadd.s32 %s67, 1
      %p71 = scmp.eq.s32.totalorder %s12, 1
      %p72 = scmp.ne.s32.totalorder %s67, %s69
      %p73 = scmp.eq.s32.totalorder %s12, 0
      %p74 = por %p72, %p73
      %p75 = scmp.ne.s32.totalorder %s67, %s69
      %p76 = scmp.eq.s32.totalorder %s17, 1
      %p77 = por %p75, %p76
      %p78 = scmp.ne.s32.totalorder %s69, %s70
      %p79 = scmp.eq.s32.totalorder %s17, 0
      %p80 = por %p78, %p79
      %p81 = scmp.ne.s32.totalorder %s69, %s70
      %p82 = scmp.eq.s32.totalorder %s18, 1
      %p83 = por %p81, %p82
      %p85 = scmp.ne.s32.totalorder %s70, %s84
      %p86 = scmp.eq.s32.totalorder %s18, 0
      %p87 = por %p85, %p86
      %s88 = ssub.s32 %s12, %s19
      %p89 = scmp.eq.s32.totalorder %s88, 0
      %s91 = sadd.s32 %s90, 1
      %s92 = scalar_select %p89, %s90, %s91
      %p95 = pneg %p89
      %p96 = scmp.eq.s32.totalorder %s12, 1
      %p97 = por %p95, %p96
      %p98 = scmp.ne.s32.totalorder %s90, %s93
      %p99 = scmp.eq.s32.totalorder %s12, 0
      %p100 = por %p98, %p99
      %p101 = scmp.ne.s32.totalorder %s90, %s93
      %p102 = scmp.eq.s32.totalorder %s17, 1
      %p103 = por %p101, %p102
      %p104 = scmp.ne.s32.totalorder %s93, %s94
      %p105 = scmp.eq.s32.totalorder %s17, 0
      %p106 = por %p104, %p105
      %p107 = scmp.ne.s32.totalorder %s93, %s94
      %p108 = scmp.eq.s32.totalorder %s18, 1
      %p109 = por %p107, %p108
      %p111 = scmp.ne.s32.totalorder %s94, %s110
      %p112 = scmp.eq.s32.totalorder %s18, 0
      %p113 = por %p111, %p112
      %p114 = scmp.le.s32.totalorder 1, %s12
      %p115 = scmp.lt.s32.totalorder %s12, 3
      %p116 = pnand %p114, %p115
      %p117 = pneg %p116
      // Predicated region
      $region9: #{tpu_custom_call.1} parent=5 // pred_check
        _
      $region10: #{tpu_custom_call.1} parent=5 // pred_check_branch
        %119 = sbr.rel (%p116) target = $region12
      $region11: #{tpu_custom_call.1} parent=5 // pred_region
        %s120 = ssub.s32 %s12, 1
        // Predicated region
        $region13: #{tpu_custom_call.1} parent=11 // pred_check
          %p121 = pneg %p59
        $region14: #{tpu_custom_call.1} parent=11 // pred_check_branch
          %123 = sbr.rel (%p121) target = $region16
        $region15: #{tpu_custom_call.1} parent=11 // pred_region
          _
        $region16: #{tpu_custom_call.1} parent=11 // pred_fallthru
          _
        // Predicated region
        $region17: #{tpu_custom_call.1} parent=11 // pred_check
          %p124 = pneg %p80
        $region18: #{tpu_custom_call.1} parent=11 // pred_check_branch
          %126 = sbr.rel (%p124) target = $region20
        $region19: #{tpu_custom_call.1} parent=11 // pred_region
          _
        $region20: #{tpu_custom_call.1} parent=11 // pred_fallthru
          _
      $region12: #{tpu_custom_call.1} parent=5 // pred_fallthru
        _
      %p127 = scmp.lt.s32.totalorder %s12, 2
      // Predicated region
      $region21: #{tpu_custom_call.1} parent=5 // pred_check
        %p128 = pneg %p127
      $region22: #{tpu_custom_call.1} parent=5 // pred_check_branch
        %130 = sbr.rel (%p128) target = $region24
      $region23: #{tpu_custom_call.1} parent=5 // pred_region
        // Predicated region
        $region25: #{tpu_custom_call.1} parent=23 // pred_check
          %p131 = pneg %p32
        $region26: #{tpu_custom_call.1} parent=23 // pred_check_branch
          %133 = sbr.rel (%p131) target = $region28
        $region27: #{tpu_custom_call.1} parent=23 // pred_region
          %s134 = smul.u32 16, %s12
          %p135 = scmp.lt.s32.totalorder %s134, 31
          %s136 = scalar_select %p135, %s134, 31
          %s137 = smul.addr %s136, 2
          %s138 = scalar_lea.vmem %s0, %s137
          %s139 = smul.u32 16, %s12
        $region28: #{tpu_custom_call.1} parent=23 // pred_fallthru
          _
      $region24: #{tpu_custom_call.1} parent=5 // pred_fallthru
        _
      %p140 = scmp.le.s32.totalorder 1, %s12
      %p141 = scmp.lt.s32.totalorder %s12, 3
      %p142 = pnand %p140, %p141
      %p143 = pneg %p142
      // Predicated region
      $region29: #{tpu_custom_call.1} parent=5 // pred_check
        _
      $region30: #{tpu_custom_call.1} parent=5 // pred_check_branch
        %145 = sbr.rel (%p142) target = $region32
      $region31: #{tpu_custom_call.1} parent=5 // pred_region
        %s146 = ssub.s32 %s12, 1
        %s147 = smul.u32 16, %s17
        %p148 = scmp.lt.s32.totalorder %s147, 31
        %s149 = scalar_select %p148, %s147, 31
        %s150 = smul.addr %s149, 2
        %s151 = scalar_lea.vmem %s0, %s150
        %p152 = pneg %p38
        %p153 = pneg %p35
        %p154 = pneg %p59
        %p155 = pneg %p56
        %p156 = pneg %p80
        %p157 = pneg %p77
        %p158 = pneg %p106
        %p159 = pneg %p103
        %s160 = sand.u32 %s93, 1
        %s161 = scalar_lea.sflag [#allocation3], %s160
        %s162 = sand.u32 %s93, 1
        %s163 = smul.addr %s162, 16
        %s164 = scalar_lea.vmem [#allocation2], %s163
        %s165 = smul.u32 16, %s17
        %p166 = scmp.lt.s32.totalorder %s165, 31
        %s167 = scalar_select %p166, %s165, 31
        %s168 = smul.addr %s167, 2
        %s169 = scalar_lea.vmem %s0, %s168
        %s170 = smul.u32 16, %s17
        %s171 = smul.u32 4, %s17
        %v173 = vld [vmem:[%s2] sm:$0xf]
        %v174 = vld [vmem:[%s169] sm:$0x3]
        %v175 = vld [vmem:[%s1] sm:$0xf]
        %v176 = vld [vmem:[%s1 + $0x4] sm:$0x3]
        %v179 = vunpack.c.l.b16 %v175
        %v180 = vunpack.c.l.b16 %v176
        %v181 = vpack.c.b16 %v180, %v179
        %vm182 = vcmask 97280
        %v184 = vsel %vm182, %v174, 0
        %vm186 = vcmask 1045504
        %v188 = vsel %vm186, %v181, 0
        %190 = vmatprep.subr.bf16.mxu0 0
        %191 = vmatpush1.bf16.msra.mxu0 %v188
        %192 = vmatprep.subr.bf16.mxu0 0
        %193 = vmatpush1.bf16.msra.mxu0 0
        %194 = vmatprep.subr.bf16.mxu0 0
        %195 = vmatpush1.bf16.msra.mxu0 0
        %196 = vmatprep.subr.bf16.mxu0 0
        %197 = vmatpush1.bf16.msra.mxu0 0
        %198 = vmatprep.subr.bf16.mxu0 0
        %199 = vmatpush1.bf16.msra.mxu0 0
        %200 = vmatprep.subr.bf16.mxu0 0
        %201 = vmatpush1.bf16.msra.mxu0 0
        %202 = vmatprep.subr.bf16.mxu0 0
        %203 = vmatpush1.bf16.msra.mxu0 0
        %204 = vmatprep.subr.bf16.mxu0 0
        %205 = vmatpush1.bf16.msra.mxu0 0
        %206 = vmatprep.subr.bf16.mxu0 0
        %207 = vmatpush1.bf16.msra.mxu0 0
        %208 = vmatprep.subr.bf16.mxu0 0
        %209 = vmatpush1.bf16.msra.mxu0 0
        %210 = vmatprep.subr.bf16.mxu0 0
        %211 = vmatpush1.bf16.msra.mxu0 0
        %212 = vmatprep.subr.bf16.mxu0 0
        %213 = vmatpush1.bf16.msra.mxu0 0
        %214 = vmatprep.subr.bf16.mxu0 0
        %215 = vmatpush1.bf16.msra.mxu0 0
        %216 = vmatprep.subr.bf16.mxu0 0
        %217 = vmatpush1.bf16.msra.mxu0 0
        %218 = vmatprep.subr.bf16.mxu0 0
        %219 = vmatpush1.bf16.msra.mxu0 0
        %220 = vmatprep.subr.bf16.mxu0 0
        %221 = vmatpush1.bf16.msra.mxu0 0
        %222 = vmatprep.mubr.bf16.mxu0 0
        %223 = vmatmul.mubr.bf16.gmra.mrb[0].mxu0 %v184
        %v224 = vpop.f32.mrb[0].mxu0
        %v225 = vadd.f32 0.0, %v224
        %v226 = vpop.f32.mrb[0].mxu0
        %v227 = vpop.f32.mrb[0].mxu0
        %v228 = vpop.f32.mrb[0].mxu0
        %229 = vdwg.mxu0
        %v230 = vadd.f32 %v173, %v225
        %s231 = scalar_lea.vmem %s169, 2
        %v232 = vld [vmem:[%s231] sm:$0x3]
        %s233 = scalar_lea.vmem %s1, 8
        %v234 = vld [vmem:[%s233] sm:$0xf]
        %v235 = vld [vmem:[%s233 + $0x4] sm:$0x3]
        %v238 = vunpack.c.l.b16 %v234
        %v239 = vunpack.c.l.b16 %v235
        %v240 = vpack.c.b16 %v239, %v238
        %v242 = vsel %vm182, %v232, 0
        %v245 = vsel %vm186, %v240, 0
        %247 = vmatprep.subr.bf16.mxu0 0
        %248 = vmatpush1.bf16.msra.mxu0 %v245
        %249 = vmatprep.subr.bf16.mxu0 0
        %250 = vmatpush1.bf16.msra.mxu0 0
        %251 = vmatprep.subr.bf16.mxu0 0
        %252 = vmatpush1.bf16.msra.mxu0 0
        %253 = vmatprep.subr.bf16.mxu0 0
        %254 = vmatpush1.bf16.msra.mxu0 0
        %255 = vmatprep.subr.bf16.mxu0 0
        %256 = vmatpush1.bf16.msra.mxu0 0
        %257 = vmatprep.subr.bf16.mxu0 0
        %258 = vmatpush1.bf16.msra.mxu0 0
        %259 = vmatprep.subr.bf16.mxu0 0
        %260 = vmatpush1.bf16.msra.mxu0 0
        %261 = vmatprep.subr.bf16.mxu0 0
        %262 = vmatpush1.bf16.msra.mxu0 0
        %263 = vmatprep.subr.bf16.mxu0 0
        %264 = vmatpush1.bf16.msra.mxu0 0
        %265 = vmatprep.subr.bf16.mxu0 0
        %266 = vmatpush1.bf16.msra.mxu0 0
        %267 = vmatprep.subr.bf16.mxu0 0
        %268 = vmatpush1.bf16.msra.mxu0 0
        %269 = vmatprep.subr.bf16.mxu0 0
        %270 = vmatpush1.bf16.msra.mxu0 0
        %271 = vmatprep.subr.bf16.mxu0 0
        %272 = vmatpush1.bf16.msra.mxu0 0
        %273 = vmatprep.subr.bf16.mxu0 0
        %274 = vmatpush1.bf16.msra.mxu0 0
        %275 = vmatprep.subr.bf16.mxu0 0
        %276 = vmatpush1.bf16.msra.mxu0 0
        %277 = vmatprep.subr.bf16.mxu0 0
        %278 = vmatpush1.bf16.msra.mxu0 0
        %279 = vmatprep.mubr.bf16.mxu0 0
        %280 = vmatmul.mubr.bf16.gmra.mrb[0].mxu0 %v242
        %v281 = vpop.f32.mrb[0].mxu0
        %v282 = vadd.f32 0.0, %v281
        %v283 = vpop.f32.mrb[0].mxu0
        %v284 = vpop.f32.mrb[0].mxu0
        %v285 = vpop.f32.mrb[0].mxu0
        %286 = vdwg.mxu0
        %v287 = vadd.f32 %v230, %v282
        %s288 = scalar_lea.vmem %s169, 4
        %v289 = vld [vmem:[%s288] sm:$0x3]
        %s290 = scalar_lea.vmem %s1, 16
        %v291 = vld [vmem:[%s290] sm:$0xf]
        %v292 = vld [vmem:[%s290 + $0x4] sm:$0x3]
        %v295 = vunpack.c.l.b16 %v291
        %v296 = vunpack.c.l.b16 %v292
        %v297 = vpack.c.b16 %v296, %v295
        %v299 = vsel %vm182, %v289, 0
        %v302 = vsel %vm186, %v297, 0
        %304 = vmatprep.subr.bf16.mxu0 0
        %305 = vmatpush1.bf16.msra.mxu0 %v302
        %306 = vmatprep.subr.bf16.mxu0 0
        %307 = vmatpush1.bf16.msra.mxu0 0
        %308 = vmatprep.subr.bf16.mxu0 0
        %309 = vmatpush1.bf16.msra.mxu0 0
        %310 = vmatprep.subr.bf16.mxu0 0
        %311 = vmatpush1.bf16.msra.mxu0 0
        %312 = vmatprep.subr.bf16.mxu0 0
        %313 = vmatpush1.bf16.msra.mxu0 0
        %314 = vmatprep.subr.bf16.mxu0 0
        %315 = vmatpush1.bf16.msra.mxu0 0
        %316 = vmatprep.subr.bf16.mxu0 0
        %317 = vmatpush1.bf16.msra.mxu0 0
        %318 = vmatprep.subr.bf16.mxu0 0
        %319 = vmatpush1.bf16.msra.mxu0 0
        %320 = vmatprep.subr.bf16.mxu0 0
        %321 = vmatpush1.bf16.msra.mxu0 0
        %322 = vmatprep.subr.bf16.mxu0 0
        %323 = vmatpush1.bf16.msra.mxu0 0
        %324 = vmatprep.subr.bf16.mxu0 0
        %325 = vmatpush1.bf16.msra.mxu0 0
        %326 = vmatprep.subr.bf16.mxu0 0
        %327 = vmatpush1.bf16.msra.mxu0 0
        %328 = vmatprep.subr.bf16.mxu0 0
        %329 = vmatpush1.bf16.msra.mxu0 0
        %330 = vmatprep.subr.bf16.mxu0 0
        %331 = vmatpush1.bf16.msra.mxu0 0
        %332 = vmatprep.subr.bf16.mxu0 0
        %333 = vmatpush1.bf16.msra.mxu0 0
        %334 = vmatprep.subr.bf16.mxu0 0
        %335 = vmatpush1.bf16.msra.mxu0 0
        %336 = vmatprep.mubr.bf16.mxu0 0
        %337 = vmatmul.mubr.bf16.gmra.mrb[0].mxu0 %v299
        %v338 = vpop.f32.mrb[0].mxu0
        %v339 = vadd.f32 0.0, %v338
        %v340 = vpop.f32.mrb[0].mxu0
        %v341 = vpop.f32.mrb[0].mxu0
        %v342 = vpop.f32.mrb[0].mxu0
        %343 = vdwg.mxu0
        %v344 = vadd.f32 %v287, %v339
        %s345 = scalar_lea.vmem %s169, 6
        %v346 = vld [vmem:[%s345] sm:$0x3]
        %s347 = scalar_lea.vmem %s1, 24
        %v348 = vld [vmem:[%s347] sm:$0xf]
        %v349 = vld [vmem:[%s347 + $0x4] sm:$0x3]
        %v352 = vunpack.c.l.b16 %v348
        %v353 = vunpack.c.l.b16 %v349
        %v354 = vpack.c.b16 %v353, %v352
        %v356 = vsel %vm182, %v346, 0
        %v359 = vsel %vm186, %v354, 0
        %361 = vmatprep.subr.bf16.mxu0 0
        %362 = vmatpush1.bf16.msra.mxu0 %v359
        %363 = vmatprep.subr.bf16.mxu0 0
        %364 = vmatpush1.bf16.msra.mxu0 0
        %365 = vmatprep.subr.bf16.mxu0 0
        %366 = vmatpush1.bf16.msra.mxu0 0
        %367 = vmatprep.subr.bf16.mxu0 0
        %368 = vmatpush1.bf16.msra.mxu0 0
        %369 = vmatprep.subr.bf16.mxu0 0
        %370 = vmatpush1.bf16.msra.mxu0 0
        %371 = vmatprep.subr.bf16.mxu0 0
        %372 = vmatpush1.bf16.msra.mxu0 0
        %373 = vmatprep.subr.bf16.mxu0 0
        %374 = vmatpush1.bf16.msra.mxu0 0
        %375 = vmatprep.subr.bf16.mxu0 0
        %376 = vmatpush1.bf16.msra.mxu0 0
        %377 = vmatprep.subr.bf16.mxu0 0
        %378 = vmatpush1.bf16.msra.mxu0 0
        %379 = vmatprep.subr.bf16.mxu0 0
        %380 = vmatpush1.bf16.msra.mxu0 0
        %381 = vmatprep.subr.bf16.mxu0 0
        %382 = vmatpush1.bf16.msra.mxu0 0
        %383 = vmatprep.subr.bf16.mxu0 0
        %384 = vmatpush1.bf16.msra.mxu0 0
        %385 = vmatprep.subr.bf16.mxu0 0
        %386 = vmatpush1.bf16.msra.mxu0 0
        %387 = vmatprep.subr.bf16.mxu0 0
        %388 = vmatpush1.bf16.msra.mxu0 0
        %389 = vmatprep.subr.bf16.mxu0 0
        %390 = vmatpush1.bf16.msra.mxu0 0
        %391 = vmatprep.subr.bf16.mxu0 0
        %392 = vmatpush1.bf16.msra.mxu0 0
        %393 = vmatprep.mubr.bf16.mxu0 0
        %394 = vmatmul.mubr.bf16.gmra.mrb[0].mxu0 %v356
        %v395 = vpop.f32.mrb[0].mxu0
        %v396 = vadd.f32 0.0, %v395
        %v397 = vpop.f32.mrb[0].mxu0
        %v398 = vpop.f32.mrb[0].mxu0
        %v399 = vpop.f32.mrb[0].mxu0
        %400 = vdwg.mxu0
        %v401 = vadd.f32 %v344, %v396
        %402 = vst [vmem:[%s164] sm:$0xf] %v401
        %s403 = scalar_lea.vmem %s2, 4
        %v404 = vld [vmem:[%s403] sm:$0xf]
        %s405 = scalar_lea.vmem %s169, 8
        %v406 = vld [vmem:[%s405] sm:$0x3]
        %v407 = vld [vmem:[%s1] sm:$0xf]
        %v408 = vld [vmem:[%s1 + $0x4] sm:$0x3]
        %v411 = vunpack.c.l.b16 %v407
        %v412 = vunpack.c.l.b16 %v408
        %v413 = vpack.c.b16 %v412, %v411
        %v415 = vsel %vm182, %v406, 0
        %v418 = vsel %vm186, %v413, 0
        %420 = vmatprep.subr.bf16.mxu0 0
        %421 = vmatpush1.bf16.msra.mxu0 %v418
        %422 = vmatprep.subr.bf16.mxu0 0
        %423 = vmatpush1.bf16.msra.mxu0 0
        %424 = vmatprep.subr.bf16.mxu0 0
        %425 = vmatpush1.bf16.msra.mxu0 0
        %426 = vmatprep.subr.bf16.mxu0 0
        %427 = vmatpush1.bf16.msra.mxu0 0
        %428 = vmatprep.subr.bf16.mxu0 0
        %429 = vmatpush1.bf16.msra.mxu0 0
        %430 = vmatprep.subr.bf16.mxu0 0
        %431 = vmatpush1.bf16.msra.mxu0 0
        %432 = vmatprep.subr.bf16.mxu0 0
        %433 = vmatpush1.bf16.msra.mxu0 0
        %434 = vmatprep.subr.bf16.mxu0 0
        %435 = vmatpush1.bf16.msra.mxu0 0
        %436 = vmatprep.subr.bf16.mxu0 0
        %437 = vmatpush1.bf16.msra.mxu0 0
        %438 = vmatprep.subr.bf16.mxu0 0
        %439 = vmatpush1.bf16.msra.mxu0 0
        %440 = vmatprep.subr.bf16.mxu0 0
        %441 = vmatpush1.bf16.msra.mxu0 0
        %442 = vmatprep.subr.bf16.mxu0 0
        %443 = vmatpush1.bf16.msra.mxu0 0
        %444 = vmatprep.subr.bf16.mxu0 0
        %445 = vmatpush1.bf16.msra.mxu0 0
        %446 = vmatprep.subr.bf16.mxu0 0
        %447 = vmatpush1.bf16.msra.mxu0 0
        %448 = vmatprep.subr.bf16.mxu0 0
        %449 = vmatpush1.bf16.msra.mxu0 0
        %450 = vmatprep.subr.bf16.mxu0 0
        %451 = vmatpush1.bf16.msra.mxu0 0
        %452 = vmatprep.mubr.bf16.mxu0 0
        %453 = vmatmul.mubr.bf16.gmra.mrb[0].mxu0 %v415
        %v454 = vpop.f32.mrb[0].mxu0
        %v455 = vadd.f32 0.0, %v454
        %v456 = vpop.f32.mrb[0].mxu0
        %v457 = vpop.f32.mrb[0].mxu0
        %v458 = vpop.f32.mrb[0].mxu0
        %459 = vdwg.mxu0
        %v460 = vadd.f32 %v404, %v455
        %s461 = scalar_lea.vmem %s169, 10
        %v462 = vld [vmem:[%s461] sm:$0x3]
        %v463 = vld [vmem:[%s233] sm:$0xf]
        %v464 = vld [vmem:[%s233 + $0x4] sm:$0x3]
        %v467 = vunpack.c.l.b16 %v463
        %v468 = vunpack.c.l.b16 %v464
        %v469 = vpack.c.b16 %v468, %v467
        %v471 = vsel %vm182, %v462, 0
        %v474 = vsel %vm186, %v469, 0
        %476 = vmatprep.subr.bf16.mxu0 0
        %477 = vmatpush1.bf16.msra.mxu0 %v474
        %478 = vmatprep.subr.bf16.mxu0 0
        %479 = vmatpush1.bf16.msra.mxu0 0
        %480 = vmatprep.subr.bf16.mxu0 0
        %481 = vmatpush1.bf16.msra.mxu0 0
        %482 = vmatprep.subr.bf16.mxu0 0
        %483 = vmatpush1.bf16.msra.mxu0 0
        %484 = vmatprep.subr.bf16.mxu0 0
        %485 = vmatpush1.bf16.msra.mxu0 0
        %486 = vmatprep.subr.bf16.mxu0 0
        %487 = vmatpush1.bf16.msra.mxu0 0
        %488 = vmatprep.subr.bf16.mxu0 0
        %489 = vmatpush1.bf16.msra.mxu0 0
        %490 = vmatprep.subr.bf16.mxu0 0
        %491 = vmatpush1.bf16.msra.mxu0 0
        %492 = vmatprep.subr.bf16.mxu0 0
        %493 = vmatpush1.bf16.msra.mxu0 0
        %494 = vmatprep.subr.bf16.mxu0 0
        %495 = vmatpush1.bf16.msra.mxu0 0
        %496 = vmatprep.subr.bf16.mxu0 0
        %497 = vmatpush1.bf16.msra.mxu0 0
        %498 = vmatprep.subr.bf16.mxu0 0
        %499 = vmatpush1.bf16.msra.mxu0 0
        %500 = vmatprep.subr.bf16.mxu0 0
        %501 = vmatpush1.bf16.msra.mxu0 0
        %502 = vmatprep.subr.bf16.mxu0 0
        %503 = vmatpush1.bf16.msra.mxu0 0
        %504 = vmatprep.subr.bf16.mxu0 0
        %505 = vmatpush1.bf16.msra.mxu0 0
        %506 = vmatprep.subr.bf16.mxu0 0
        %507 = vmatpush1.bf16.msra.mxu0 0
        %508 = vmatprep.mubr.bf16.mxu0 0
        %509 = vmatmul.mubr.bf16.gmra.mrb[0].mxu0 %v471
        %v510 = vpop.f32.mrb[0].mxu0
        %v511 = vadd.f32 0.0, %v510
        %v512 = vpop.f32.mrb[0].mxu0
        %v513 = vpop.f32.mrb[0].mxu0
        %v514 = vpop.f32.mrb[0].mxu0
        %515 = vdwg.mxu0
        %v516 = vadd.f32 %v460, %v511
        %s517 = scalar_lea.vmem %s169, 12
        %v518 = vld [vmem:[%s517] sm:$0x3]
        %v519 = vld [vmem:[%s290] sm:$0xf]
        %v520 = vld [vmem:[%s290 + $0x4] sm:$0x3]
        %v523 = vunpack.c.l.b16 %v519
        %v524 = vunpack.c.l.b16 %v520
        %v525 = vpack.c.b16 %v524, %v523
        %v527 = vsel %vm182, %v518, 0
        %v530 = vsel %vm186, %v525, 0
        %532 = vmatprep.subr.bf16.mxu0 0
        %533 = vmatpush1.bf16.msra.mxu0 %v530
        %534 = vmatprep.subr.bf16.mxu0 0
        %535 = vmatpush1.bf16.msra.mxu0 0
        %536 = vmatprep.subr.bf16.mxu0 0
        %537 = vmatpush1.bf16.msra.mxu0 0
        %538 = vmatprep.subr.bf16.mxu0 0
        %539 = vmatpush1.bf16.msra.mxu0 0
        %540 = vmatprep.subr.bf16.mxu0 0
        %541 = vmatpush1.bf16.msra.mxu0 0
        %542 = vmatprep.subr.bf16.mxu0 0
        %543 = vmatpush1.bf16.msra.mxu0 0
        %544 = vmatprep.subr.bf16.mxu0 0
        %545 = vmatpush1.bf16.msra.mxu0 0
        %546 = vmatprep.subr.bf16.mxu0 0
        %547 = vmatpush1.bf16.msra.mxu0 0
        %548 = vmatprep.subr.bf16.mxu0 0
        %549 = vmatpush1.bf16.msra.mxu0 0
        %550 = vmatprep.subr.bf16.mxu0 0
        %551 = vmatpush1.bf16.msra.mxu0 0
        %552 = vmatprep.subr.bf16.mxu0 0
        %553 = vmatpush1.bf16.msra.mxu0 0
        %554 = vmatprep.subr.bf16.mxu0 0
        %555 = vmatpush1.bf16.msra.mxu0 0
        %556 = vmatprep.subr.bf16.mxu0 0
        %557 = vmatpush1.bf16.msra.mxu0 0
        %558 = vmatprep.subr.bf16.mxu0 0
        %559 = vmatpush1.bf16.msra.mxu0 0
        %560 = vmatprep.subr.bf16.mxu0 0
        %561 = vmatpush1.bf16.msra.mxu0 0
        %562 = vmatprep.subr.bf16.mxu0 0
        %563 = vmatpush1.bf16.msra.mxu0 0
        %564 = vmatprep.mubr.bf16.mxu0 0
        %565 = vmatmul.mubr.bf16.gmra.mrb[0].mxu0 %v527
        %v566 = vpop.f32.mrb[0].mxu0
        %v567 = vadd.f32 0.0, %v566
        %v568 = vpop.f32.mrb[0].mxu0
        %v569 = vpop.f32.mrb[0].mxu0
        %v570 = vpop.f32.mrb[0].mxu0
        %571 = vdwg.mxu0
        %v572 = vadd.f32 %v516, %v567
        %s573 = scalar_lea.vmem %s169, 14
        %v574 = vld [vmem:[%s573] sm:$0x3]
        %v575 = vld [vmem:[%s347] sm:$0xf]
        %v576 = vld [vmem:[%s347 + $0x4] sm:$0x3]
        %v579 = vunpack.c.l.b16 %v575
        %v580 = vunpack.c.l.b16 %v576
        %v581 = vpack.c.b16 %v580, %v579
        %v583 = vsel %vm182, %v574, 0
        %v586 = vsel %vm186, %v581, 0
        %588 = vmatprep.subr.bf16.mxu0 0
        %589 = vmatpush1.bf16.msra.mxu0 %v586
        %590 = vmatprep.subr.bf16.mxu0 0
        %591 = vmatpush1.bf16.msra.mxu0 0
        %592 = vmatprep.subr.bf16.mxu0 0
        %593 = vmatpush1.bf16.msra.mxu0 0
        %594 = vmatprep.subr.bf16.mxu0 0
        %595 = vmatpush1.bf16.msra.mxu0 0
        %596 = vmatprep.subr.bf16.mxu0 0
        %597 = vmatpush1.bf16.msra.mxu0 0
        %598 = vmatprep.subr.bf16.mxu0 0
        %599 = vmatpush1.bf16.msra.mxu0 0
        %600 = vmatprep.subr.bf16.mxu0 0
        %601 = vmatpush1.bf16.msra.mxu0 0
        %602 = vmatprep.subr.bf16.mxu0 0
        %603 = vmatpush1.bf16.msra.mxu0 0
        %604 = vmatprep.subr.bf16.mxu0 0
        %605 = vmatpush1.bf16.msra.mxu0 0
        %606 = vmatprep.subr.bf16.mxu0 0
        %607 = vmatpush1.bf16.msra.mxu0 0
        %608 = vmatprep.subr.bf16.mxu0 0
        %609 = vmatpush1.bf16.msra.mxu0 0
        %610 = vmatprep.subr.bf16.mxu0 0
        %611 = vmatpush1.bf16.msra.mxu0 0
        %612 = vmatprep.subr.bf16.mxu0 0
        %613 = vmatpush1.bf16.msra.mxu0 0
        %614 = vmatprep.subr.bf16.mxu0 0
        %615 = vmatpush1.bf16.msra.mxu0 0
        %616 = vmatprep.subr.bf16.mxu0 0
        %617 = vmatpush1.bf16.msra.mxu0 0
        %618 = vmatprep.subr.bf16.mxu0 0
        %619 = vmatpush1.bf16.msra.mxu0 0
        %620 = vmatprep.mubr.bf16.mxu0 0
        %621 = vmatmul.mubr.bf16.gmra.mrb[0].mxu0 %v583
        %v622 = vpop.f32.mrb[0].mxu0
        %v623 = vadd.f32 0.0, %v622
        %v624 = vpop.f32.mrb[0].mxu0
        %v625 = vpop.f32.mrb[0].mxu0
        %v626 = vpop.f32.mrb[0].mxu0
        %627 = vdwg.mxu0
        %v628 = vadd.f32 %v572, %v623
        %s629 = scalar_lea.vmem %s164, 4 [#allocation2]
        %630 = vst [vmem:[%s629] sm:$0xf] %v628
        %s631 = scalar_lea.vmem %s2, 8
        %v632 = vld [vmem:[%s631] sm:$0xf]
        %s633 = scalar_lea.vmem %s169, 16
        %v634 = vld [vmem:[%s633] sm:$0x3]
        %v635 = vld [vmem:[%s1] sm:$0xf]
        %v636 = vld [vmem:[%s1 + $0x4] sm:$0x3]
        %v639 = vunpack.c.l.b16 %v635
        %v640 = vunpack.c.l.b16 %v636
        %v641 = vpack.c.b16 %v640, %v639
        %v643 = vsel %vm182, %v634, 0
        %v646 = vsel %vm186, %v641, 0
        %648 = vmatprep.subr.bf16.mxu0 0
        %649 = vmatpush1.bf16.msra.mxu0 %v646
        %650 = vmatprep.subr.bf16.mxu0 0
        %651 = vmatpush1.bf16.msra.mxu0 0
        %652 = vmatprep.subr.bf16.mxu0 0
        %653 = vmatpush1.bf16.msra.mxu0 0
        %654 = vmatprep.subr.bf16.mxu0 0
        %655 = vmatpush1.bf16.msra.mxu0 0
        %656 = vmatprep.subr.bf16.mxu0 0
        %657 = vmatpush1.bf16.msra.mxu0 0
        %658 = vmatprep.subr.bf16.mxu0 0
        %659 = vmatpush1.bf16.msra.mxu0 0
        %660 = vmatprep.subr.bf16.mxu0 0
        %661 = vmatpush1.bf16.msra.mxu0 0
        %662 = vmatprep.subr.bf16.mxu0 0
        %663 = vmatpush1.bf16.msra.mxu0 0
        %664 = vmatprep.subr.bf16.mxu0 0
        %665 = vmatpush1.bf16.msra.mxu0 0
        %666 = vmatprep.subr.bf16.mxu0 0
        %667 = vmatpush1.bf16.msra.mxu0 0
        %668 = vmatprep.subr.bf16.mxu0 0
        %669 = vmatpush1.bf16.msra.mxu0 0
        %670 = vmatprep.subr.bf16.mxu0 0
        %671 = vmatpush1.bf16.msra.mxu0 0
        %672 = vmatprep.subr.bf16.mxu0 0
        %673 = vmatpush1.bf16.msra.mxu0 0
        %674 = vmatprep.subr.bf16.mxu0 0
        %675 = vmatpush1.bf16.msra.mxu0 0
        %676 = vmatprep.subr.bf16.mxu0 0
        %677 = vmatpush1.bf16.msra.mxu0 0
        %678 = vmatprep.subr.bf16.mxu0 0
        %679 = vmatpush1.bf16.msra.mxu0 0
        %680 = vmatprep.mubr.bf16.mxu0 0
        %681 = vmatmul.mubr.bf16.gmra.mrb[0].mxu0 %v643
        %v682 = vpop.f32.mrb[0].mxu0
        %v683 = vadd.f32 0.0, %v682
        %v684 = vpop.f32.mrb[0].mxu0
        %v685 = vpop.f32.mrb[0].mxu0
        %v686 = vpop.f32.mrb[0].mxu0
        %687 = vdwg.mxu0
        %v688 = vadd.f32 %v632, %v683
        %s689 = scalar_lea.vmem %s169, 18
        %v690 = vld [vmem:[%s689] sm:$0x3]
        %v691 = vld [vmem:[%s233] sm:$0xf]
        %v692 = vld [vmem:[%s233 + $0x4] sm:$0x3]
        %v695 = vunpack.c.l.b16 %v691
        %v696 = vunpack.c.l.b16 %v692
        %v697 = vpack.c.b16 %v696, %v695
        %v699 = vsel %vm182, %v690, 0
        %v702 = vsel %vm186, %v697, 0
        %704 = vmatprep.subr.bf16.mxu0 0
        %705 = vmatpush1.bf16.msra.mxu0 %v702
        %706 = vmatprep.subr.bf16.mxu0 0
        %707 = vmatpush1.bf16.msra.mxu0 0
        %708 = vmatprep.subr.bf16.mxu0 0
        %709 = vmatpush1.bf16.msra.mxu0 0
        %710 = vmatprep.subr.bf16.mxu0 0
        %711 = vmatpush1.bf16.msra.mxu0 0
        %712 = vmatprep.subr.bf16.mxu0 0
        %713 = vmatpush1.bf16.msra.mxu0 0
        %714 = vmatprep.subr.bf16.mxu0 0
        %715 = vmatpush1.bf16.msra.mxu0 0
        %716 = vmatprep.subr.bf16.mxu0 0
        %717 = vmatpush1.bf16.msra.mxu0 0
        %718 = vmatprep.subr.bf16.mxu0 0
        %719 = vmatpush1.bf16.msra.mxu0 0
        %720 = vmatprep.subr.bf16.mxu0 0
        %721 = vmatpush1.bf16.msra.mxu0 0
        %722 = vmatprep.subr.bf16.mxu0 0
        %723 = vmatpush1.bf16.msra.mxu0 0
        %724 = vmatprep.subr.bf16.mxu0 0
        %725 = vmatpush1.bf16.msra.mxu0 0
        %726 = vmatprep.subr.bf16.mxu0 0
        %727 = vmatpush1.bf16.msra.mxu0 0
        %728 = vmatprep.subr.bf16.mxu0 0
        %729 = vmatpush1.bf16.msra.mxu0 0
        %730 = vmatprep.subr.bf16.mxu0 0
        %731 = vmatpush1.bf16.msra.mxu0 0
        %732 = vmatprep.subr.bf16.mxu0 0
        %733 = vmatpush1.bf16.msra.mxu0 0
        %734 = vmatprep.subr.bf16.mxu0 0
        %735 = vmatpush1.bf16.msra.mxu0 0
        %736 = vmatprep.mubr.bf16.mxu0 0
        %737 = vmatmul.mubr.bf16.gmra.mrb[0].mxu0 %v699
        %v738 = vpop.f32.mrb[0].mxu0
        %v739 = vadd.f32 0.0, %v738
        %v740 = vpop.f32.mrb[0].mxu0
        %v741 = vpop.f32.mrb[0].mxu0
        %v742 = vpop.f32.mrb[0].mxu0
        %743 = vdwg.mxu0
        %v744 = vadd.f32 %v688, %v739
        %s745 = scalar_lea.vmem %s169, 20
        %v746 = vld [vmem:[%s745] sm:$0x3]
        %v747 = vld [vmem:[%s290] sm:$0xf]
        %v748 = vld [vmem:[%s290 + $0x4] sm:$0x3]
        %v751 = vunpack.c.l.b16 %v747
        %v752 = vunpack.c.l.b16 %v748
        %v753 = vpack.c.b16 %v752, %v751
        %v755 = vsel %vm182, %v746, 0
        %v758 = vsel %vm186, %v753, 0
        %760 = vmatprep.subr.bf16.mxu0 0
        %761 = vmatpush1.bf16.msra.mxu0 %v758
        %762 = vmatprep.subr.bf16.mxu0 0
        %763 = vmatpush1.bf16.msra.mxu0 0
        %764 = vmatprep.subr.bf16.mxu0 0
        %765 = vmatpush1.bf16.msra.mxu0 0
        %766 = vmatprep.subr.bf16.mxu0 0
        %767 = vmatpush1.bf16.msra.mxu0 0
        %768 = vmatprep.subr.bf16.mxu0 0
        %769 = vmatpush1.bf16.msra.mxu0 0
        %770 = vmatprep.subr.bf16.mxu0 0
        %771 = vmatpush1.bf16.msra.mxu0 0
        %772 = vmatprep.subr.bf16.mxu0 0
        %773 = vmatpush1.bf16.msra.mxu0 0
        %774 = vmatprep.subr.bf16.mxu0 0
        %775 = vmatpush1.bf16.msra.mxu0 0
        %776 = vmatprep.subr.bf16.mxu0 0
        %777 = vmatpush1.bf16.msra.mxu0 0
        %778 = vmatprep.subr.bf16.mxu0 0
        %779 = vmatpush1.bf16.msra.mxu0 0
        %780 = vmatprep.subr.bf16.mxu0 0
        %781 = vmatpush1.bf16.msra.mxu0 0
        %782 = vmatprep.subr.bf16.mxu0 0
        %783 = vmatpush1.bf16.msra.mxu0 0
        %784 = vmatprep.subr.bf16.mxu0 0
        %785 = vmatpush1.bf16.msra.mxu0 0
        %786 = vmatprep.subr.bf16.mxu0 0
        %787 = vmatpush1.bf16.msra.mxu0 0
        %788 = vmatprep.subr.bf16.mxu0 0
        %789 = vmatpush1.bf16.msra.mxu0 0
        %790 = vmatprep.subr.bf16.mxu0 0
        %791 = vmatpush1.bf16.msra.mxu0 0
        %792 = vmatprep.mubr.bf16.mxu0 0
        %793 = vmatmul.mubr.bf16.gmra.mrb[0].mxu0 %v755
        %v794 = vpop.f32.mrb[0].mxu0
        %v795 = vadd.f32 0.0, %v794
        %v796 = vpop.f32.mrb[0].mxu0
        %v797 = vpop.f32.mrb[0].mxu0
        %v798 = vpop.f32.mrb[0].mxu0
        %799 = vdwg.mxu0
        %v800 = vadd.f32 %v744, %v795
        %s801 = scalar_lea.vmem %s169, 22
        %v802 = vld [vmem:[%s801] sm:$0x3]
        %v803 = vld [vmem:[%s347] sm:$0xf]
        %v804 = vld [vmem:[%s347 + $0x4] sm:$0x3]
        %v807 = vunpack.c.l.b16 %v803
        %v808 = vunpack.c.l.b16 %v804
        %v809 = vpack.c.b16 %v808, %v807
        %v811 = vsel %vm182, %v802, 0
        %v814 = vsel %vm186, %v809, 0
        %816 = vmatprep.subr.bf16.mxu0 0
        %817 = vmatpush1.bf16.msra.mxu0 %v814
        %818 = vmatprep.subr.bf16.mxu0 0
        %819 = vmatpush1.bf16.msra.mxu0 0
        %820 = vmatprep.subr.bf16.mxu0 0
        %821 = vmatpush1.bf16.msra.mxu0 0
        %822 = vmatprep.subr.bf16.mxu0 0
        %823 = vmatpush1.bf16.msra.mxu0 0
        %824 = vmatprep.subr.bf16.mxu0 0
        %825 = vmatpush1.bf16.msra.mxu0 0
        %826 = vmatprep.subr.bf16.mxu0 0
        %827 = vmatpush1.bf16.msra.mxu0 0
        %828 = vmatprep.subr.bf16.mxu0 0
        %829 = vmatpush1.bf16.msra.mxu0 0
        %830 = vmatprep.subr.bf16.mxu0 0
        %831 = vmatpush1.bf16.msra.mxu0 0
        %832 = vmatprep.subr.bf16.mxu0 0
        %833 = vmatpush1.bf16.msra.mxu0 0
        %834 = vmatprep.subr.bf16.mxu0 0
        %835 = vmatpush1.bf16.msra.mxu0 0
        %836 = vmatprep.subr.bf16.mxu0 0
        %837 = vmatpush1.bf16.msra.mxu0 0
        %838 = vmatprep.subr.bf16.mxu0 0
        %839 = vmatpush1.bf16.msra.mxu0 0
        %840 = vmatprep.subr.bf16.mxu0 0
        %841 = vmatpush1.bf16.msra.mxu0 0
        %842 = vmatprep.subr.bf16.mxu0 0
        %843 = vmatpush1.bf16.msra.mxu0 0
        %844 = vmatprep.subr.bf16.mxu0 0
        %845 = vmatpush1.bf16.msra.mxu0 0
        %846 = vmatprep.subr.bf16.mxu0 0
        %847 = vmatpush1.bf16.msra.mxu0 0
        %848 = vmatprep.mubr.bf16.mxu0 0
        %849 = vmatmul.mubr.bf16.gmra.mrb[0].mxu0 %v811
        %v850 = vpop.f32.mrb[0].mxu0
        %v851 = vadd.f32 0.0, %v850
        %v852 = vpop.f32.mrb[0].mxu0
        %v853 = vpop.f32.mrb[0].mxu0
        %v854 = vpop.f32.mrb[0].mxu0
        %855 = vdwg.mxu0
        %v856 = vadd.f32 %v800, %v851
        %s857 = scalar_lea.vmem %s164, 8 [#allocation2]
        %858 = vst [vmem:[%s857] sm:$0xf] %v856
        %s859 = scalar_lea.vmem %s2, 12
        %v860 = vld [vmem:[%s859] sm:$0xf]
        %s861 = scalar_lea.vmem %s169, 24
        %v862 = vld [vmem:[%s861] sm:$0x3]
        %v863 = vld [vmem:[%s1] sm:$0xf]
        %v864 = vld [vmem:[%s1 + $0x4] sm:$0x3]
        %v867 = vunpack.c.l.b16 %v863
        %v868 = vunpack.c.l.b16 %v864
        %v869 = vpack.c.b16 %v868, %v867
        %v871 = vsel %vm182, %v862, 0
        %v874 = vsel %vm186, %v869, 0
        %876 = vmatprep.subr.bf16.mxu0 0
        %877 = vmatpush1.bf16.msra.mxu0 %v874
        %878 = vmatprep.subr.bf16.mxu0 0
        %879 = vmatpush1.bf16.msra.mxu0 0
        %880 = vmatprep.subr.bf16.mxu0 0
        %881 = vmatpush1.bf16.msra.mxu0 0
        %882 = vmatprep.subr.bf16.mxu0 0
        %883 = vmatpush1.bf16.msra.mxu0 0
        %884 = vmatprep.subr.bf16.mxu0 0
        %885 = vmatpush1.bf16.msra.mxu0 0
        %886 = vmatprep.subr.bf16.mxu0 0
        %887 = vmatpush1.bf16.msra.mxu0 0
        %888 = vmatprep.subr.bf16.mxu0 0
        %889 = vmatpush1.bf16.msra.mxu0 0
        %890 = vmatprep.subr.bf16.mxu0 0
        %891 = vmatpush1.bf16.msra.mxu0 0
        %892 = vmatprep.subr.bf16.mxu0 0
        %893 = vmatpush1.bf16.msra.mxu0 0
        %894 = vmatprep.subr.bf16.mxu0 0
        %895 = vmatpush1.bf16.msra.mxu0 0
        %896 = vmatprep.subr.bf16.mxu0 0
        %897 = vmatpush1.bf16.msra.mxu0 0
        %898 = vmatprep.subr.bf16.mxu0 0
        %899 = vmatpush1.bf16.msra.mxu0 0
        %900 = vmatprep.subr.bf16.mxu0 0
        %901 = vmatpush1.bf16.msra.mxu0 0
        %902 = vmatprep.subr.bf16.mxu0 0
        %903 = vmatpush1.bf16.msra.mxu0 0
        %904 = vmatprep.subr.bf16.mxu0 0
        %905 = vmatpush1.bf16.msra.mxu0 0
        %906 = vmatprep.subr.bf16.mxu0 0
        %907 = vmatpush1.bf16.msra.mxu0 0
        %908 = vmatprep.mubr.bf16.mxu0 0
        %909 = vmatmul.mubr.bf16.gmra.mrb[0].mxu0 %v871
        %v910 = vpop.f32.mrb[0].mxu0
        %v911 = vadd.f32 0.0, %v910
        %v912 = vpop.f32.mrb[0].mxu0
        %v913 = vpop.f32.mrb[0].mxu0
        %v914 = vpop.f32.mrb[0].mxu0
        %915 = vdwg.mxu0
        %v916 = vadd.f32 %v860, %v911
        %s917 = scalar_lea.vmem %s169, 26
        %v918 = vld [vmem:[%s917] sm:$0x3]
        %v919 = vld [vmem:[%s233] sm:$0xf]
        %v920 = vld [vmem:[%s233 + $0x4] sm:$0x3]
        %v923 = vunpack.c.l.b16 %v919
        %v924 = vunpack.c.l.b16 %v920
        %v925 = vpack.c.b16 %v924, %v923
        %v927 = vsel %vm182, %v918, 0
        %v930 = vsel %vm186, %v925, 0
        %932 = vmatprep.subr.bf16.mxu0 0
        %933 = vmatpush1.bf16.msra.mxu0 %v930
        %934 = vmatprep.subr.bf16.mxu0 0
        %935 = vmatpush1.bf16.msra.mxu0 0
        %936 = vmatprep.subr.bf16.mxu0 0
        %937 = vmatpush1.bf16.msra.mxu0 0
        %938 = vmatprep.subr.bf16.mxu0 0
        %939 = vmatpush1.bf16.msra.mxu0 0
        %940 = vmatprep.subr.bf16.mxu0 0
        %941 = vmatpush1.bf16.msra.mxu0 0
        %942 = vmatprep.subr.bf16.mxu0 0
        %943 = vmatpush1.bf16.msra.mxu0 0
        %944 = vmatprep.subr.bf16.mxu0 0
        %945 = vmatpush1.bf16.msra.mxu0 0
        %946 = vmatprep.subr.bf16.mxu0 0
        %947 = vmatpush1.bf16.msra.mxu0 0
        %948 = vmatprep.subr.bf16.mxu0 0
        %949 = vmatpush1.bf16.msra.mxu0 0
        %950 = vmatprep.subr.bf16.mxu0 0
        %951 = vmatpush1.bf16.msra.mxu0 0
        %952 = vmatprep.subr.bf16.mxu0 0
        %953 = vmatpush1.bf16.msra.mxu0 0
        %954 = vmatprep.subr.bf16.mxu0 0
        %955 = vmatpush1.bf16.msra.mxu0 0
        %956 = vmatprep.subr.bf16.mxu0 0
        %957 = vmatpush1.bf16.msra.mxu0 0
        %958 = vmatprep.subr.bf16.mxu0 0
        %959 = vmatpush1.bf16.msra.mxu0 0
        %960 = vmatprep.subr.bf16.mxu0 0
        %961 = vmatpush1.bf16.msra.mxu0 0
        %962 = vmatprep.subr.bf16.mxu0 0
        %963 = vmatpush1.bf16.msra.mxu0 0
        %964 = vmatprep.mubr.bf16.mxu0 0
        %965 = vmatmul.mubr.bf16.gmra.mrb[0].mxu0 %v927
        %v966 = vpop.f32.mrb[0].mxu0
        %v967 = vadd.f32 0.0, %v966
        %v968 = vpop.f32.mrb[0].mxu0
        %v969 = vpop.f32.mrb[0].mxu0
        %v970 = vpop.f32.mrb[0].mxu0
        %971 = vdwg.mxu0
        %v972 = vadd.f32 %v916, %v967
        %s973 = scalar_lea.vmem %s169, 28
        %v974 = vld [vmem:[%s973] sm:$0x3]
        %v975 = vld [vmem:[%s290] sm:$0xf]
        %v976 = vld [vmem:[%s290 + $0x4] sm:$0x3]
        %v979 = vunpack.c.l.b16 %v975
        %v980 = vunpack.c.l.b16 %v976
        %v981 = vpack.c.b16 %v980, %v979
        %v983 = vsel %vm182, %v974, 0
        %v986 = vsel %vm186, %v981, 0
        %988 = vmatprep.subr.bf16.mxu0 0
        %989 = vmatpush1.bf16.msra.mxu0 %v986
        %990 = vmatprep.subr.bf16.mxu0 0
        %991 = vmatpush1.bf16.msra.mxu0 0
        %992 = vmatprep.subr.bf16.mxu0 0
        %993 = vmatpush1.bf16.msra.mxu0 0
        %994 = vmatprep.subr.bf16.mxu0 0
        %995 = vmatpush1.bf16.msra.mxu0 0
        %996 = vmatprep.subr.bf16.mxu0 0
        %997 = vmatpush1.bf16.msra.mxu0 0
        %998 = vmatprep.subr.bf16.mxu0 0
        %999 = vmatpush1.bf16.msra.mxu0 0
        %1000 = vmatprep.subr.bf16.mxu0 0
        %1001 = vmatpush1.bf16.msra.mxu0 0
        %1002 = vmatprep.subr.bf16.mxu0 0
        %1003 = vmatpush1.bf16.msra.mxu0 0
        %1004 = vmatprep.subr.bf16.mxu0 0
        %1005 = vmatpush1.bf16.msra.mxu0 0
        %1006 = vmatprep.subr.bf16.mxu0 0
        %1007 = vmatpush1.bf16.msra.mxu0 0
        %1008 = vmatprep.subr.bf16.mxu0 0
        %1009 = vmatpush1.bf16.msra.mxu0 0
        %1010 = vmatprep.subr.bf16.mxu0 0
        %1011 = vmatpush1.bf16.msra.mxu0 0
        %1012 = vmatprep.subr.bf16.mxu0 0
        %1013 = vmatpush1.bf16.msra.mxu0 0
        %1014 = vmatprep.subr.bf16.mxu0 0
        %1015 = vmatpush1.bf16.msra.mxu0 0
        %1016 = vmatprep.subr.bf16.mxu0 0
        %1017 = vmatpush1.bf16.msra.mxu0 0
        %1018 = vmatprep.subr.bf16.mxu0 0
        %1019 = vmatpush1.bf16.msra.mxu0 0
        %1020 = vmatprep.mubr.bf16.mxu0 0
        %1021 = vmatmul.mubr.bf16.gmra.mrb[0].mxu0 %v983
        %v1022 = vpop.f32.mrb[0].mxu0
        %v1023 = vadd.f32 0.0, %v1022
        %v1024 = vpop.f32.mrb[0].mxu0
        %v1025 = vpop.f32.mrb[0].mxu0
        %v1026 = vpop.f32.mrb[0].mxu0
        %1027 = vdwg.mxu0
        %v1028 = vadd.f32 %v972, %v1023
        %s1029 = scalar_lea.vmem %s169, 30
        %v1030 = vld [vmem:[%s1029] sm:$0x3]
        %v1031 = vld [vmem:[%s347] sm:$0xf]
        %v1032 = vld [vmem:[%s347 + $0x4] sm:$0x3]
        %v1035 = vunpack.c.l.b16 %v1031
        %v1036 = vunpack.c.l.b16 %v1032
        %v1037 = vpack.c.b16 %v1036, %v1035
        %v1039 = vsel %vm182, %v1030, 0
        %v1042 = vsel %vm186, %v1037, 0
        %1044 = vmatprep.subr.bf16.mxu0 0
        %1045 = vmatpush1.bf16.msra.mxu0 %v1042
        %1046 = vmatprep.subr.bf16.mxu0 0
        %1047 = vmatpush1.bf16.msra.mxu0 0
        %1048 = vmatprep.subr.bf16.mxu0 0
        %1049 = vmatpush1.bf16.msra.mxu0 0
        %1050 = vmatprep.subr.bf16.mxu0 0
        %1051 = vmatpush1.bf16.msra.mxu0 0
        %1052 = vmatprep.subr.bf16.mxu0 0
        %1053 = vmatpush1.bf16.msra.mxu0 0
        %1054 = vmatprep.subr.bf16.mxu0 0
        %1055 = vmatpush1.bf16.msra.mxu0 0
        %1056 = vmatprep.subr.bf16.mxu0 0
        %1057 = vmatpush1.bf16.msra.mxu0 0
        %1058 = vmatprep.subr.bf16.mxu0 0
        %1059 = vmatpush1.bf16.msra.mxu0 0
        %1060 = vmatprep.subr.bf16.mxu0 0
        %1061 = vmatpush1.bf16.msra.mxu0 0
        %1062 = vmatprep.subr.bf16.mxu0 0
        %1063 = vmatpush1.bf16.msra.mxu0 0
        %1064 = vmatprep.subr.bf16.mxu0 0
        %1065 = vmatpush1.bf16.msra.mxu0 0
        %1066 = vmatprep.subr.bf16.mxu0 0
        %1067 = vmatpush1.bf16.msra.mxu0 0
        %1068 = vmatprep.subr.bf16.mxu0 0
        %1069 = vmatpush1.bf16.msra.mxu0 0
        %1070 = vmatprep.subr.bf16.mxu0 0
        %1071 = vmatpush1.bf16.msra.mxu0 0
        %1072 = vmatprep.subr.bf16.mxu0 0
        %1073 = vmatpush1.bf16.msra.mxu0 0
        %1074 = vmatprep.subr.bf16.mxu0 0
        %1075 = vmatpush1.bf16.msra.mxu0 0
        %1076 = vmatprep.mubr.bf16.mxu0 0
        %1077 = vmatmul.mubr.bf16.gmra.mrb[0].mxu0 %v1039
        %v1078 = vpop.f32.mrb[0].mxu0
        %v1079 = vadd.f32 0.0, %v1078
        %v1080 = vpop.f32.mrb[0].mxu0
        %v1081 = vpop.f32.mrb[0].mxu0
        %v1082 = vpop.f32.mrb[0].mxu0
        %1083 = vdwg.mxu0
        %v1084 = vadd.f32 %v1028, %v1079
        %s1085 = scalar_lea.vmem %s164, 12 [#allocation2]
        %1086 = vst [vmem:[%s1085] sm:$0xf] %v1084
        %s1087 = sand.u32 %s93, 1
        %s1088 = scalar_lea.sflag [#allocation3], %s1087
        %s1089 = sand.u32 %s93, 1
        %s1090 = smul.addr %s1089, 16
        %s1091 = scalar_lea.vmem [#allocation2], %s1090
        // Predicated region
        $region33: #{tpu_custom_call.1} parent=31 // pred_check
          %p1092 = pneg %p103
        $region34: #{tpu_custom_call.1} parent=31 // pred_check_branch
          %1094 = sbr.rel (%p1092) target = $region36
        $region35: #{tpu_custom_call.1} parent=31 // pred_region
          %s1095 = smul.u32 4, %s17
          %s1097 = ssub.s32 256, 256
          %1098 = vsyncadd %s1088, %s1097
          %s1099 = smul.addr %s1095, 64
          %s1100 = scalar_lea.hbm %s3, %s1099
          %s1101 = sshll.u32 %s1091, 4
          %s1102 = int_to_ptr.vmem [resolvable:$true] %s1101
          %1107 = dma.vmem_to_hbm [thread:$0]  %s1102, 256, %s1100, %s1088, 64, 64, 4
        $region36: #{tpu_custom_call.1} parent=31 // pred_fallthru
          _
      $region32: #{tpu_custom_call.1} parent=5 // pred_fallthru
        _
      %p1108 = scmp.le.s32.totalorder 2, %s12
      // Predicated region
      $region37: #{tpu_custom_call.1} parent=5 // pred_check
        %p1109 = pneg %p1108
      $region38: #{tpu_custom_call.1} parent=5 // pred_check_branch
        %1111 = sbr.rel (%p1109) target = $region40
      $region39: #{tpu_custom_call.1} parent=5 // pred_region
        %s1112 = ssub.s32 %s12, 2
        // Predicated region
        $region41: #{tpu_custom_call.1} parent=39 // pred_check
          %p1113 = pneg %p109
        $region42: #{tpu_custom_call.1} parent=39 // pred_check_branch
          %1115 = sbr.rel (%p1113) target = $region44
        $region43: #{tpu_custom_call.1} parent=39 // pred_region
          %s1116 = sand.u32 %s94, 1
          %s1117 = scalar_lea.sflag [#allocation3], %s1116
          %s1118 = sand.u32 %s94, 1
          %s1119 = smul.addr %s1118, 16
          %s1120 = scalar_lea.vmem [#allocation2], %s1119
          %1121 = dma.done %s1117, 256
        $region44: #{tpu_custom_call.1} parent=39 // pred_fallthru
          _
      $region40: #{tpu_custom_call.1} parent=5 // pred_fallthru
        _
    $region6: #{tpu_custom_call.1} parent=1 // loop_footer
      %s16 = sadd.s32 1, %s12
    $region7: #{tpu_custom_call.1} parent=1 // loop_footer_branch
      %11 = sbr.rel target = $region3
    $region8: #{tpu_custom_call.1} parent=1 // loop_exit
      _
    %1122 = vsyncpa [#allocation3], 1
    %s1123 = scalar_lea.sflag [#allocation3], 1
    %1124 = vsyncpa %s1123, 1

// kernel: tpu_custom_call.1
$region0: #{tpu_custom_call.1}
  #allocation0 [shape = 'u32[]', space=smem, size = 0x4, offset = 0x4, fixed_abs, tag = 'smem constant byte address 0x4 - core index']
  #allocation1 [shape = 'u32[144,128]{1,0:T(1,128)}', space=vmem, size = 0x12000, scoped, tag = 'internal scratch']
  %s0 = inlined_call_operand.vmem [shape: bf16[32,4,12], index: 0, kind: input, shape index: {}]
  %s1 = inlined_call_operand.vmem [shape: bf16[4,12,128], index: 1, kind: input, shape index: {}]
  %s2 = inlined_call_operand.vmem [shape: f32[4,4,128], index: 2, kind: input, shape index: {}]
  %s3 = inlined_call_operand.hbm [shape: f32[8,4,128], index: 3, kind: output, shape index: {}]
  %s4 = sld [smem:[#allocation0]]
  $region45: #{tpu_custom_call.1} parent=0
    _
  %s6 = ssub.s32 1, %s4
  %s7 = scalar_select 0, %s6, %s4
  $region1: #{tpu_custom_call.1} parent=0
    #allocation2 [shape = 'u8[16384]{0}', space=vmem, size = 0x4000, scoped, tag = 'output window, operand 0']
    #allocation3 [shape = 's32[2]{0}', space=sflag, size = 0x8, scoped, tag = 'scoped memory for tpu_custom_call.1']
    %8 = vsyncpa [#allocation3], 0
    %s9 = scalar_lea.sflag [#allocation3], 1
    %10 = vsyncpa %s9, 0
    loop: start=0, step=1, limit=4
    $region2: #{tpu_custom_call.1} parent=1 // loop_pre_header
      _
    $region3: #{tpu_custom_call.1} parent=1 // loop_header
      %s12 = sphi 0, %s16
      %p13 = scmp.ge.s32.totalorder %s12, 4
      %s22 = sphi 0, %s24
      %s25 = sphi 0, %s22
      %s26 = sphi 0, %s25
      %s42 = sphi 0, %s26
      %s46 = sphi 0, %s46
      %s48 = sphi 0, %s46
      %s49 = sphi 0, %s48
      %s63 = sphi 0, %s49
      %s67 = sphi 0, %s67
      %s69 = sphi 0, %s67
      %s70 = sphi 0, %s69
      %s84 = sphi 0, %s70
      %s90 = sphi 0, %s92
      %s93 = sphi 0, %s90
      %s94 = sphi 0, %s93
      %s110 = sphi 0, %s94
    $region4: #{tpu_custom_call.1} parent=1 // loop_header_branch
      %15 = sbr.rel (%p13) target = $region8
    $region5: #{tpu_custom_call.1} parent=1 // loop_body
      %s17 = ssub.s32 %s12, 1
      %s18 = ssub.s32 %s12, 2
      %s19 = sadd.s32 %s12, 1
      %s20 = ssub.s32 %s12, %s19
      %p21 = scmp.eq.s32.totalorder %s20, 0
      %s23 = sadd.s32 %s22, 1
      %s24 = scalar_select %p21, %s22, %s23
      %p27 = pneg %p21
      %p28 = scmp.eq.s32.totalorder %s12, 1
      %p29 = por %p27, %p28
      %p30 = scmp.ne.s32.totalorder %s22, %s25
      %p31 = scmp.eq.s32.totalorder %s12, 0
      %p32 = por %p30, %p31
      %p33 = scmp.ne.s32.totalorder %s22, %s25
      %p34 = scmp.eq.s32.totalorder %s17, 1
      %p35 = por %p33, %p34
      %p36 = scmp.ne.s32.totalorder %s25, %s26
      %p37 = scmp.eq.s32.totalorder %s17, 0
      %p38 = por %p36, %p37
      %p39 = scmp.ne.s32.totalorder %s25, %s26
      %p40 = scmp.eq.s32.totalorder %s18, 1
      %p41 = por %p39, %p40
      %p43 = scmp.ne.s32.totalorder %s26, %s42
      %p44 = scmp.eq.s32.totalorder %s18, 0
      %p45 = por %p43, %p44
      %s47 = sadd.s32 %s46, 1
      %p50 = scmp.eq.s32.totalorder %s12, 1
      %p51 = scmp.ne.s32.totalorder %s46, %s48
      %p52 = scmp.eq.s32.totalorder %s12, 0
      %p53 = por %p51, %p52
      %p54 = scmp.ne.s32.totalorder %s46, %s48
      %p55 = scmp.eq.s32.totalorder %s17, 1
      %p56 = por %p54, %p55
      %p57 = scmp.ne.s32.totalorder %s48, %s49
      %p58 = scmp.eq.s32.totalorder %s17, 0
      %p59 = por %p57, %p58
      %p60 = scmp.ne.s32.totalorder %s48, %s49
      %p61 = scmp.eq.s32.totalorder %s18, 1
      %p62 = por %p60, %p61
      %p64 = scmp.ne.s32.totalorder %s49, %s63
      %p65 = scmp.eq.s32.totalorder %s18, 0
      %p66 = por %p64, %p65
      %s68 = sadd.s32 %s67, 1
      %p71 = scmp.eq.s32.totalorder %s12, 1
      %p72 = scmp.ne.s32.totalorder %s67, %s69
      %p73 = scmp.eq.s32.totalorder %s12, 0
      %p74 = por %p72, %p73
      %p75 = scmp.ne.s32.totalorder %s67, %s69
      %p76 = scmp.eq.s32.totalorder %s17, 1
      %p77 = por %p75, %p76
      %p78 = scmp.ne.s32.totalorder %s69, %s70
      %p79 = scmp.eq.s32.totalorder %s17, 0
      %p80 = por %p78, %p79
      %p81 = scmp.ne.s32.totalorder %s69, %s70
      %p82 = scmp.eq.s32.totalorder %s18, 1
      %p83 = por %p81, %p82
      %p85 = scmp.ne.s32.totalorder %s70, %s84
      %p86 = scmp.eq.s32.totalorder %s18, 0
      %p87 = por %p85, %p86
      %s88 = ssub.s32 %s12, %s19
      %p89 = scmp.eq.s32.totalorder %s88, 0
      %s91 = sadd.s32 %s90, 1
      %s92 = scalar_select %p89, %s90, %s91
      %p95 = pneg %p89
      %p96 = scmp.eq.s32.totalorder %s12, 1
      %p97 = por %p95, %p96
      %p98 = scmp.ne.s32.totalorder %s90, %s93
      %p99 = scmp.eq.s32.totalorder %s12, 0
      %p100 = por %p98, %p99
      %p101 = scmp.ne.s32.totalorder %s90, %s93
      %p102 = scmp.eq.s32.totalorder %s17, 1
      %p103 = por %p101, %p102
      %p104 = scmp.ne.s32.totalorder %s93, %s94
      %p105 = scmp.eq.s32.totalorder %s17, 0
      %p106 = por %p104, %p105
      %p107 = scmp.ne.s32.totalorder %s93, %s94
      %p108 = scmp.eq.s32.totalorder %s18, 1
      %p109 = por %p107, %p108
      %p111 = scmp.ne.s32.totalorder %s94, %s110
      %p112 = scmp.eq.s32.totalorder %s18, 0
      %p113 = por %p111, %p112
      %p114 = scmp.le.s32.totalorder 1, %s12
      %p115 = scmp.lt.s32.totalorder %s12, 3
      %p116 = pnand %p114, %p115
      %p117 = pneg %p116
      // Predicated region
      $region9: #{tpu_custom_call.1} parent=5 // pred_check
        _
      $region10: #{tpu_custom_call.1} parent=5 // pred_check_branch
        %119 = sbr.rel (%p116) target = $region12
      $region11: #{tpu_custom_call.1} parent=5 // pred_region
        %s120 = ssub.s32 %s12, 1
        // Predicated region
        $region13: #{tpu_custom_call.1} parent=11 // pred_check
          %p121 = pneg %p59
        $region14: #{tpu_custom_call.1} parent=11 // pred_check_branch
          %123 = sbr.rel (%p121) target = $region16
        $region15: #{tpu_custom_call.1} parent=11 // pred_region
          _
        $region16: #{tpu_custom_call.1} parent=11 // pred_fallthru
          _
        // Predicated region
        $region17: #{tpu_custom_call.1} parent=11 // pred_check
          %p124 = pneg %p80
        $region18: #{tpu_custom_call.1} parent=11 // pred_check_branch
          %126 = sbr.rel (%p124) target = $region20
        $region19: #{tpu_custom_call.1} parent=11 // pred_region
          _
        $region20: #{tpu_custom_call.1} parent=11 // pred_fallthru
          _
      $region12: #{tpu_custom_call.1} parent=5 // pred_fallthru
        _
      %p127 = scmp.lt.s32.totalorder %s12, 2
      // Predicated region
      $region21: #{tpu_custom_call.1} parent=5 // pred_check
        %p128 = pneg %p127
      $region22: #{tpu_custom_call.1} parent=5 // pred_check_branch
        %130 = sbr.rel (%p128) target = $region24
      $region23: #{tpu_custom_call.1} parent=5 // pred_region
        // Predicated region
        $region25: #{tpu_custom_call.1} parent=23 // pred_check
          %p131 = pneg %p32
        $region26: #{tpu_custom_call.1} parent=23 // pred_check_branch
          %133 = sbr.rel (%p131) target = $region28
        $region27: #{tpu_custom_call.1} parent=23 // pred_region
          %s134 = smul.u32 16, %s12
          %p135 = scmp.lt.s32.totalorder %s134, 31
          %s136 = scalar_select %p135, %s134, 31
          %s137 = smul.addr %s136, 2
          %s138 = scalar_lea.vmem %s0, %s137
          %s139 = smul.u32 16, %s12
        $region28: #{tpu_custom_call.1} parent=23 // pred_fallthru
          _
      $region24: #{tpu_custom_call.1} parent=5 // pred_fallthru
        _
      %p140 = scmp.le.s32.totalorder 1, %s12
      %p141 = scmp.lt.s32.totalorder %s12, 3
      %p142 = pnand %p140, %p141
      %p143 = pneg %p142
      // Predicated region
      $region29: #{tpu_custom_call.1} parent=5 // pred_check
        _
      $region30: #{tpu_custom_call.1} parent=5 // pred_check_branch
        %145 = sbr.rel (%p142) target = $region32
      $region31: #{tpu_custom_call.1} parent=5 // pred_region
        %s146 = ssub.s32 %s12, 1
        %s147 = smul.u32 16, %s17
        %p148 = scmp.lt.s32.totalorder %s147, 31
        %s149 = scalar_select %p148, %s147, 31
        %s150 = smul.addr %s149, 2
        %s151 = scalar_lea.vmem %s0, %s150
        %p152 = pneg %p38
        %p153 = pneg %p35
        %p154 = pneg %p59
        %p155 = pneg %p56
        %p156 = pneg %p80
        %p157 = pneg %p77
        %p158 = pneg %p106
        %p159 = pneg %p103
        %s160 = sand.u32 %s93, 1
        %s161 = scalar_lea.sflag [#allocation3], %s160
        %s162 = sand.u32 %s93, 1
        %s163 = smul.addr %s162, 16
        %s164 = scalar_lea.vmem [#allocation2], %s163
        %s165 = smul.u32 16, %s17
        %p166 = scmp.lt.s32.totalorder %s165, 31
        %s167 = scalar_select %p166, %s165, 31
        %s168 = smul.addr %s167, 2
        %s169 = scalar_lea.vmem %s0, %s168
        %s170 = smul.u32 16, %s17
        %s171 = smul.u32 4, %s17
        %v173 = vld [vmem:[%s2] sm:$0xf]
        %v174 = vld [vmem:[%s169] sm:$0x3]
        %v175 = vld [vmem:[%s1] sm:$0xf]
        %v176 = vld [vmem:[%s1 + $0x4] sm:$0x3]
        %v179 = vunpack.c.l.b16 %v175
        %v180 = vunpack.c.l.b16 %v176
        %v181 = vpack.c.b16 %v180, %v179
        %vm182 = vcmask 97280
        %v184 = vsel %vm182, %v174, 0
        %vm186 = vcmask 1045504
        %v188 = vsel %vm186, %v181, 0
        %190 = vmatprep.subr.bf16.mxu0 0
        %191 = vmatpush1.bf16.msra.mxu0 %v188
        %192 = vmatprep.subr.bf16.mxu0 0
        %193 = vmatpush1.bf16.msra.mxu0 0
        %194 = vmatprep.subr.bf16.mxu0 0
        %195 = vmatpush1.bf16.msra.mxu0 0
        %196 = vmatprep.subr.bf16.mxu0 0
        %197 = vmatpush1.bf16.msra.mxu0 0
        %198 = vmatprep.subr.bf16.mxu0 0
        %199 = vmatpush1.bf16.msra.mxu0 0
        %200 = vmatprep.subr.bf16.mxu0 0
        %201 = vmatpush1.bf16.msra.mxu0 0
        %202 = vmatprep.subr.bf16.mxu0 0
        %203 = vmatpush1.bf16.msra.mxu0 0
        %204 = vmatprep.subr.bf16.mxu0 0
        %205 = vmatpush1.bf16.msra.mxu0 0
        %206 = vmatprep.subr.bf16.mxu0 0
        %207 = vmatpush1.bf16.msra.mxu0 0
        %208 = vmatprep.subr.bf16.mxu0 0
        %209 = vmatpush1.bf16.msra.mxu0 0
        %210 = vmatprep.subr.bf16.mxu0 0
        %211 = vmatpush1.bf16.msra.mxu0 0
        %212 = vmatprep.subr.bf16.mxu0 0
        %213 = vmatpush1.bf16.msra.mxu0 0
        %214 = vmatprep.subr.bf16.mxu0 0
        %215 = vmatpush1.bf16.msra.mxu0 0
        %216 = vmatprep.subr.bf16.mxu0 0
        %217 = vmatpush1.bf16.msra.mxu0 0
        %218 = vmatprep.subr.bf16.mxu0 0
        %219 = vmatpush1.bf16.msra.mxu0 0
        %220 = vmatprep.subr.bf16.mxu0 0
        %221 = vmatpush1.bf16.msra.mxu0 0
        %222 = vmatprep.mubr.bf16.mxu0 0
        %223 = vmatmul.mubr.bf16.gmra.mrb[0].mxu0 %v184
        %v224 = vpop.f32.mrb[0].mxu0
        %v225 = vadd.f32 0.0, %v224
        %v226 = vpop.f32.mrb[0].mxu0
        %v227 = vpop.f32.mrb[0].mxu0
        %v228 = vpop.f32.mrb[0].mxu0
        %229 = vdwg.mxu0
        %v230 = vadd.f32 %v173, %v225
        %s231 = scalar_lea.vmem %s169, 2
        %v232 = vld [vmem:[%s231] sm:$0x3]
        %s233 = scalar_lea.vmem %s1, 8
        %v234 = vld [vmem:[%s233] sm:$0xf]
        %v235 = vld [vmem:[%s233 + $0x4] sm:$0x3]
        %v238 = vunpack.c.l.b16 %v234
        %v239 = vunpack.c.l.b16 %v235
        %v240 = vpack.c.b16 %v239, %v238
        %v242 = vsel %vm182, %v232, 0
        %v245 = vsel %vm186, %v240, 0
        %247 = vmatprep.subr.bf16.mxu0 0
        %248 = vmatpush1.bf16.msra.mxu0 %v245
        %249 = vmatprep.subr.bf16.mxu0 0
        %250 = vmatpush1.bf16.msra.mxu0 0
        %251 = vmatprep.subr.bf16.mxu0 0
        %252 = vmatpush1.bf16.msra.mxu0 0
        %253 = vmatprep.subr.bf16.mxu0 0
        %254 = vmatpush1.bf16.msra.mxu0 0
        %255 = vmatprep.subr.bf16.mxu0 0
        %256 = vmatpush1.bf16.msra.mxu0 0
        %257 = vmatprep.subr.bf16.mxu0 0
        %258 = vmatpush1.bf16.msra.mxu0 0
        %259 = vmatprep.subr.bf16.mxu0 0
        %260 = vmatpush1.bf16.msra.mxu0 0
        %261 = vmatprep.subr.bf16.mxu0 0
        %262 = vmatpush1.bf16.msra.mxu0 0
        %263 = vmatprep.subr.bf16.mxu0 0
        %264 = vmatpush1.bf16.msra.mxu0 0
        %265 = vmatprep.subr.bf16.mxu0 0
        %266 = vmatpush1.bf16.msra.mxu0 0
        %267 = vmatprep.subr.bf16.mxu0 0
        %268 = vmatpush1.bf16.msra.mxu0 0
        %269 = vmatprep.subr.bf16.mxu0 0
        %270 = vmatpush1.bf16.msra.mxu0 0
        %271 = vmatprep.subr.bf16.mxu0 0
        %272 = vmatpush1.bf16.msra.mxu0 0
        %273 = vmatprep.subr.bf16.mxu0 0
        %274 = vmatpush1.bf16.msra.mxu0 0
        %275 = vmatprep.subr.bf16.mxu0 0
        %276 = vmatpush1.bf16.msra.mxu0 0
        %277 = vmatprep.subr.bf16.mxu0 0
        %278 = vmatpush1.bf16.msra.mxu0 0
        %279 = vmatprep.mubr.bf16.mxu0 0
        %280 = vmatmul.mubr.bf16.gmra.mrb[0].mxu0 %v242
        %v281 = vpop.f32.mrb[0].mxu0
        %v282 = vadd.f32 0.0, %v281
        %v283 = vpop.f32.mrb[0].mxu0
        %v284 = vpop.f32.mrb[0].mxu0
        %v285 = vpop.f32.mrb[0].mxu0
        %286 = vdwg.mxu0
        %v287 = vadd.f32 %v230, %v282
        %s288 = scalar_lea.vmem %s169, 4
        %v289 = vld [vmem:[%s288] sm:$0x3]
        %s290 = scalar_lea.vmem %s1, 16
        %v291 = vld [vmem:[%s290] sm:$0xf]
        %v292 = vld [vmem:[%s290 + $0x4] sm:$0x3]
        %v295 = vunpack.c.l.b16 %v291
        %v296 = vunpack.c.l.b16 %v292
        %v297 = vpack.c.b16 %v296, %v295
        %v299 = vsel %vm182, %v289, 0
        %v302 = vsel %vm186, %v297, 0
        %304 = vmatprep.subr.bf16.mxu0 0
        %305 = vmatpush1.bf16.msra.mxu0 %v302
        %306 = vmatprep.subr.bf16.mxu0 0
        %307 = vmatpush1.bf16.msra.mxu0 0
        %308 = vmatprep.subr.bf16.mxu0 0
        %309 = vmatpush1.bf16.msra.mxu0 0
        %310 = vmatprep.subr.bf16.mxu0 0
        %311 = vmatpush1.bf16.msra.mxu0 0
        %312 = vmatprep.subr.bf16.mxu0 0
        %313 = vmatpush1.bf16.msra.mxu0 0
        %314 = vmatprep.subr.bf16.mxu0 0
        %315 = vmatpush1.bf16.msra.mxu0 0
        %316 = vmatprep.subr.bf16.mxu0 0
        %317 = vmatpush1.bf16.msra.mxu0 0
        %318 = vmatprep.subr.bf16.mxu0 0
        %319 = vmatpush1.bf16.msra.mxu0 0
        %320 = vmatprep.subr.bf16.mxu0 0
        %321 = vmatpush1.bf16.msra.mxu0 0
        %322 = vmatprep.subr.bf16.mxu0 0
        %323 = vmatpush1.bf16.msra.mxu0 0
        %324 = vmatprep.subr.bf16.mxu0 0
        %325 = vmatpush1.bf16.msra.mxu0 0
        %326 = vmatprep.subr.bf16.mxu0 0
        %327 = vmatpush1.bf16.msra.mxu0 0
        %328 = vmatprep.subr.bf16.mxu0 0
        %329 = vmatpush1.bf16.msra.mxu0 0
        %330 = vmatprep.subr.bf16.mxu0 0
        %331 = vmatpush1.bf16.msra.mxu0 0
        %332 = vmatprep.subr.bf16.mxu0 0
        %333 = vmatpush1.bf16.msra.mxu0 0
        %334 = vmatprep.subr.bf16.mxu0 0
        %335 = vmatpush1.bf16.msra.mxu0 0
        %336 = vmatprep.mubr.bf16.mxu0 0
        %337 = vmatmul.mubr.bf16.gmra.mrb[0].mxu0 %v299
        %v338 = vpop.f32.mrb[0].mxu0
        %v339 = vadd.f32 0.0, %v338
        %v340 = vpop.f32.mrb[0].mxu0
        %v341 = vpop.f32.mrb[0].mxu0
        %v342 = vpop.f32.mrb[0].mxu0
        %343 = vdwg.mxu0
        %v344 = vadd.f32 %v287, %v339
        %s345 = scalar_lea.vmem %s169, 6
        %v346 = vld [vmem:[%s345] sm:$0x3]
        %s347 = scalar_lea.vmem %s1, 24
        %v348 = vld [vmem:[%s347] sm:$0xf]
        %v349 = vld [vmem:[%s347 + $0x4] sm:$0x3]
        %v352 = vunpack.c.l.b16 %v348
        %v353 = vunpack.c.l.b16 %v349
        %v354 = vpack.c.b16 %v353, %v352
        %v356 = vsel %vm182, %v346, 0
        %v359 = vsel %vm186, %v354, 0
        %361 = vmatprep.subr.bf16.mxu0 0
        %362 = vmatpush1.bf16.msra.mxu0 %v359
        %363 = vmatprep.subr.bf16.mxu0 0
        %364 = vmatpush1.bf16.msra.mxu0 0
        %365 = vmatprep.subr.bf16.mxu0 0
        %366 = vmatpush1.bf16.msra.mxu0 0
        %367 = vmatprep.subr.bf16.mxu0 0
        %368 = vmatpush1.bf16.msra.mxu0 0
        %369 = vmatprep.subr.bf16.mxu0 0
        %370 = vmatpush1.bf16.msra.mxu0 0
        %371 = vmatprep.subr.bf16.mxu0 0
        %372 = vmatpush1.bf16.msra.mxu0 0
        %373 = vmatprep.subr.bf16.mxu0 0
        %374 = vmatpush1.bf16.msra.mxu0 0
        %375 = vmatprep.subr.bf16.mxu0 0
        %376 = vmatpush1.bf16.msra.mxu0 0
        %377 = vmatprep.subr.bf16.mxu0 0
        %378 = vmatpush1.bf16.msra.mxu0 0
        %379 = vmatprep.subr.bf16.mxu0 0
        %380 = vmatpush1.bf16.msra.mxu0 0
        %381 = vmatprep.subr.bf16.mxu0 0
        %382 = vmatpush1.bf16.msra.mxu0 0
        %383 = vmatprep.subr.bf16.mxu0 0
        %384 = vmatpush1.bf16.msra.mxu0 0
        %385 = vmatprep.subr.bf16.mxu0 0
        %386 = vmatpush1.bf16.msra.mxu0 0
        %387 = vmatprep.subr.bf16.mxu0 0
        %388 = vmatpush1.bf16.msra.mxu0 0
        %389 = vmatprep.subr.bf16.mxu0 0
        %390 = vmatpush1.bf16.msra.mxu0 0
        %391 = vmatprep.subr.bf16.mxu0 0
        %392 = vmatpush1.bf16.msra.mxu0 0
        %393 = vmatprep.mubr.bf16.mxu0 0
        %394 = vmatmul.mubr.bf16.gmra.mrb[0].mxu0 %v356
        %v395 = vpop.f32.mrb[0].mxu0
        %v396 = vadd.f32 0.0, %v395
        %v397 = vpop.f32.mrb[0].mxu0
        %v398 = vpop.f32.mrb[0].mxu0
        %v399 = vpop.f32.mrb[0].mxu0
        %400 = vdwg.mxu0
        %v401 = vadd.f32 %v344, %v396
        %402 = vst [vmem:[%s164] sm:$0xf] %v401
        %s403 = scalar_lea.vmem %s2, 4
        %v404 = vld [vmem:[%s403] sm:$0xf]
        %s405 = scalar_lea.vmem %s169, 8
        %v406 = vld [vmem:[%s405] sm:$0x3]
        %v407 = vld [vmem:[%s1] sm:$0xf]
        %v408 = vld [vmem:[%s1 + $0x4] sm:$0x3]
        %v411 = vunpack.c.l.b16 %v407
        %v412 = vunpack.c.l.b16 %v408
        %v413 = vpack.c.b16 %v412, %v411
        %v415 = vsel %vm182, %v406, 0
        %v418 = vsel %vm186, %v413, 0
        %420 = vmatprep.subr.bf16.mxu0 0
        %421 = vmatpush1.bf16.msra.mxu0 %v418
        %422 = vmatprep.subr.bf16.mxu0 0
        %423 = vmatpush1.bf16.msra.mxu0 0
        %424 = vmatprep.subr.bf16.mxu0 0
        %425 = vmatpush1.bf16.msra.mxu0 0
        %426 = vmatprep.subr.bf16.mxu0 0
        %427 = vmatpush1.bf16.msra.mxu0 0
        %428 = vmatprep.subr.bf16.mxu0 0
        %429 = vmatpush1.bf16.msra.mxu0 0
        %430 = vmatprep.subr.bf16.mxu0 0
        %431 = vmatpush1.bf16.msra.mxu0 0
        %432 = vmatprep.subr.bf16.mxu0 0
        %433 = vmatpush1.bf16.msra.mxu0 0
        %434 = vmatprep.subr.bf16.mxu0 0
        %435 = vmatpush1.bf16.msra.mxu0 0
        %436 = vmatprep.subr.bf16.mxu0 0
        %437 = vmatpush1.bf16.msra.mxu0 0
        %438 = vmatprep.subr.bf16.mxu0 0
        %439 = vmatpush1.bf16.msra.mxu0 0
        %440 = vmatprep.subr.bf16.mxu0 0
        %441 = vmatpush1.bf16.msra.mxu0 0
        %442 = vmatprep.subr.bf16.mxu0 0
        %443 = vmatpush1.bf16.msra.mxu0 0
        %444 = vmatprep.subr.bf16.mxu0 0
        %445 = vmatpush1.bf16.msra.mxu0 0
        %446 = vmatprep.subr.bf16.mxu0 0
        %447 = vmatpush1.bf16.msra.mxu0 0
        %448 = vmatprep.subr.bf16.mxu0 0
        %449 = vmatpush1.bf16.msra.mxu0 0
        %450 = vmatprep.subr.bf16.mxu0 0
        %451 = vmatpush1.bf16.msra.mxu0 0
        %452 = vmatprep.mubr.bf16.mxu0 0
        %453 = vmatmul.mubr.bf16.gmra.mrb[0].mxu0 %v415
        %v454 = vpop.f32.mrb[0].mxu0
        %v455 = vadd.f32 0.0, %v454
        %v456 = vpop.f32.mrb[0].mxu0
        %v457 = vpop.f32.mrb[0].mxu0
        %v458 = vpop.f32.mrb[0].mxu0
        %459 = vdwg.mxu0
        %v460 = vadd.f32 %v404, %v455
        %s461 = scalar_lea.vmem %s169, 10
        %v462 = vld [vmem:[%s461] sm:$0x3]
        %v463 = vld [vmem:[%s233] sm:$0xf]
        %v464 = vld [vmem:[%s233 + $0x4] sm:$0x3]
        %v467 = vunpack.c.l.b16 %v463
        %v468 = vunpack.c.l.b16 %v464
        %v469 = vpack.c.b16 %v468, %v467
        %v471 = vsel %vm182, %v462, 0
        %v474 = vsel %vm186, %v469, 0
        %476 = vmatprep.subr.bf16.mxu0 0
        %477 = vmatpush1.bf16.msra.mxu0 %v474
        %478 = vmatprep.subr.bf16.mxu0 0
        %479 = vmatpush1.bf16.msra.mxu0 0
        %480 = vmatprep.subr.bf16.mxu0 0
        %481 = vmatpush1.bf16.msra.mxu0 0
        %482 = vmatprep.subr.bf16.mxu0 0
        %483 = vmatpush1.bf16.msra.mxu0 0
        %484 = vmatprep.subr.bf16.mxu0 0
        %485 = vmatpush1.bf16.msra.mxu0 0
        %486 = vmatprep.subr.bf16.mxu0 0
        %487 = vmatpush1.bf16.msra.mxu0 0
        %488 = vmatprep.subr.bf16.mxu0 0
        %489 = vmatpush1.bf16.msra.mxu0 0
        %490 = vmatprep.subr.bf16.mxu0 0
        %491 = vmatpush1.bf16.msra.mxu0 0
        %492 = vmatprep.subr.bf16.mxu0 0
        %493 = vmatpush1.bf16.msra.mxu0 0
        %494 = vmatprep.subr.bf16.mxu0 0
        %495 = vmatpush1.bf16.msra.mxu0 0
        %496 = vmatprep.subr.bf16.mxu0 0
        %497 = vmatpush1.bf16.msra.mxu0 0
        %498 = vmatprep.subr.bf16.mxu0 0
        %499 = vmatpush1.bf16.msra.mxu0 0
        %500 = vmatprep.subr.bf16.mxu0 0
        %501 = vmatpush1.bf16.msra.mxu0 0
        %502 = vmatprep.subr.bf16.mxu0 0
        %503 = vmatpush1.bf16.msra.mxu0 0
        %504 = vmatprep.subr.bf16.mxu0 0
        %505 = vmatpush1.bf16.msra.mxu0 0
        %506 = vmatprep.subr.bf16.mxu0 0
        %507 = vmatpush1.bf16.msra.mxu0 0
        %508 = vmatprep.mubr.bf16.mxu0 0
        %509 = vmatmul.mubr.bf16.gmra.mrb[0].mxu0 %v471
        %v510 = vpop.f32.mrb[0].mxu0
        %v511 = vadd.f32 0.0, %v510
        %v512 = vpop.f32.mrb[0].mxu0
        %v513 = vpop.f32.mrb[0].mxu0
        %v514 = vpop.f32.mrb[0].mxu0
        %515 = vdwg.mxu0
        %v516 = vadd.f32 %v460, %v511
        %s517 = scalar_lea.vmem %s169, 12
        %v518 = vld [vmem:[%s517] sm:$0x3]
        %v519 = vld [vmem:[%s290] sm:$0xf]
        %v520 = vld [vmem:[%s290 + $0x4] sm:$0x3]
        %v523 = vunpack.c.l.b16 %v519
        %v524 = vunpack.c.l.b16 %v520
        %v525 = vpack.c.b16 %v524, %v523
        %v527 = vsel %vm182, %v518, 0
        %v530 = vsel %vm186, %v525, 0
        %532 = vmatprep.subr.bf16.mxu0 0
        %533 = vmatpush1.bf16.msra.mxu0 %v530
        %534 = vmatprep.subr.bf16.mxu0 0
        %535 = vmatpush1.bf16.msra.mxu0 0
        %536 = vmatprep.subr.bf16.mxu0 0
        %537 = vmatpush1.bf16.msra.mxu0 0
        %538 = vmatprep.subr.bf16.mxu0 0
        %539 = vmatpush1.bf16.msra.mxu0 0
        %540 = vmatprep.subr.bf16.mxu0 0
        %541 = vmatpush1.bf16.msra.mxu0 0
        %542 = vmatprep.subr.bf16.mxu0 0
        %543 = vmatpush1.bf16.msra.mxu0 0
        %544 = vmatprep.subr.bf16.mxu0 0
        %545 = vmatpush1.bf16.msra.mxu0 0
        %546 = vmatprep.subr.bf16.mxu0 0
        %547 = vmatpush1.bf16.msra.mxu0 0
        %548 = vmatprep.subr.bf16.mxu0 0
        %549 = vmatpush1.bf16.msra.mxu0 0
        %550 = vmatprep.subr.bf16.mxu0 0
        %551 = vmatpush1.bf16.msra.mxu0 0
        %552 = vmatprep.subr.bf16.mxu0 0
        %553 = vmatpush1.bf16.msra.mxu0 0
        %554 = vmatprep.subr.bf16.mxu0 0
        %555 = vmatpush1.bf16.msra.mxu0 0
        %556 = vmatprep.subr.bf16.mxu0 0
        %557 = vmatpush1.bf16.msra.mxu0 0
        %558 = vmatprep.subr.bf16.mxu0 0
        %559 = vmatpush1.bf16.msra.mxu0 0
        %560 = vmatprep.subr.bf16.mxu0 0
        %561 = vmatpush1.bf16.msra.mxu0 0
        %562 = vmatprep.subr.bf16.mxu0 0
        %563 = vmatpush1.bf16.msra.mxu0 0
        %564 = vmatprep.mubr.bf16.mxu0 0
        %565 = vmatmul.mubr.bf16.gmra.mrb[0].mxu0 %v527
        %v566 = vpop.f32.mrb[0].mxu0
        %v567 = vadd.f32 0.0, %v566
        %v568 = vpop.f32.mrb[0].mxu0
        %v569 = vpop.f32.mrb[0].mxu0
        %v570 = vpop.f32.mrb[0].mxu0
        %571 = vdwg.mxu0
        %v572 = vadd.f32 %v516, %v567
        %s573 = scalar_lea.vmem %s169, 14
        %v574 = vld [vmem:[%s573] sm:$0x3]
        %v575 = vld [vmem:[%s347] sm:$0xf]
        %v576 = vld [vmem:[%s347 + $0x4] sm:$0x3]
        %v579 = vunpack.c.l.b16 %v575
        %v580 = vunpack.c.l.b16 %v576
        %v581 = vpack.c.b16 %v580, %v579
        %v583 = vsel %vm182, %v574, 0
        %v586 = vsel %vm186, %v581, 0
        %588 = vmatprep.subr.bf16.mxu0 0
        %589 = vmatpush1.bf16.msra.mxu0 %v586
        %590 = vmatprep.subr.bf16.mxu0 0
        %591 = vmatpush1.bf16.msra.mxu0 0
        %592 = vmatprep.subr.bf16.mxu0 0
        %593 = vmatpush1.bf16.msra.mxu0 0
        %594 = vmatprep.subr.bf16.mxu0 0
        %595 = vmatpush1.bf16.msra.mxu0 0
        %596 = vmatprep.subr.bf16.mxu0 0
        %597 = vmatpush1.bf16.msra.mxu0 0
        %598 = vmatprep.subr.bf16.mxu0 0
        %599 = vmatpush1.bf16.msra.mxu0 0
        %600 = vmatprep.subr.bf16.mxu0 0
        %601 = vmatpush1.bf16.msra.mxu0 0
        %602 = vmatprep.subr.bf16.mxu0 0
        %603 = vmatpush1.bf16.msra.mxu0 0
        %604 = vmatprep.subr.bf16.mxu0 0
        %605 = vmatpush1.bf16.msra.mxu0 0
        %606 = vmatprep.subr.bf16.mxu0 0
        %607 = vmatpush1.bf16.msra.mxu0 0
        %608 = vmatprep.subr.bf16.mxu0 0
        %609 = vmatpush1.bf16.msra.mxu0 0
        %610 = vmatprep.subr.bf16.mxu0 0
        %611 = vmatpush1.bf16.msra.mxu0 0
        %612 = vmatprep.subr.bf16.mxu0 0
        %613 = vmatpush1.bf16.msra.mxu0 0
        %614 = vmatprep.subr.bf16.mxu0 0
        %615 = vmatpush1.bf16.msra.mxu0 0
        %616 = vmatprep.subr.bf16.mxu0 0
        %617 = vmatpush1.bf16.msra.mxu0 0
        %618 = vmatprep.subr.bf16.mxu0 0
        %619 = vmatpush1.bf16.msra.mxu0 0
        %620 = vmatprep.mubr.bf16.mxu0 0
        %621 = vmatmul.mubr.bf16.gmra.mrb[0].mxu0 %v583
        %v622 = vpop.f32.mrb[0].mxu0
        %v623 = vadd.f32 0.0, %v622
        %v624 = vpop.f32.mrb[0].mxu0
        %v625 = vpop.f32.mrb[0].mxu0
        %v626 = vpop.f32.mrb[0].mxu0
        %627 = vdwg.mxu0
        %v628 = vadd.f32 %v572, %v623
        %s629 = scalar_lea.vmem %s164, 4 [#allocation2]
        %630 = vst [vmem:[%s629] sm:$0xf] %v628
        %s631 = scalar_lea.vmem %s2, 8
        %v632 = vld [vmem:[%s631] sm:$0xf]
        %s633 = scalar_lea.vmem %s169, 16
        %v634 = vld [vmem:[%s633] sm:$0x3]
        %v635 = vld [vmem:[%s1] sm:$0xf]
        %v636 = vld [vmem:[%s1 + $0x4] sm:$0x3]
        %v639 = vunpack.c.l.b16 %v635
        %v640 = vunpack.c.l.b16 %v636
        %v641 = vpack.c.b16 %v640, %v639
        %v643 = vsel %vm182, %v634, 0
        %v646 = vsel %vm186, %v641, 0
        %648 = vmatprep.subr.bf16.mxu0 0
        %649 = vmatpush1.bf16.msra.mxu0 %v646
        %650 = vmatprep.subr.bf16.mxu0 0
        %651 = vmatpush1.bf16.msra.mxu0 0
        %652 = vmatprep.subr.bf16.mxu0 0
        %653 = vmatpush1.bf16.msra.mxu0 0
        %654 = vmatprep.subr.bf16.mxu0 0
        %655 = vmatpush1.bf16.msra.mxu0 0
        %656 = vmatprep.subr.bf16.mxu0 0
        %657 = vmatpush1.bf16.msra.mxu0 0
        %658 = vmatprep.subr.bf16.mxu0 0
        %659 = vmatpush1.bf16.msra.mxu0 0
        %660 = vmatprep.subr.bf16.mxu0 0
        %661 = vmatpush1.bf16.msra.mxu0 0
        %662 = vmatprep.subr.bf16.mxu0 0
        %663 = vmatpush1.bf16.msra.mxu0 0
        %664 = vmatprep.subr.bf16.mxu0 0
        %665 = vmatpush1.bf16.msra.mxu0 0
        %666 = vmatprep.subr.bf16.mxu0 0
        %667 = vmatpush1.bf16.msra.mxu0 0
        %668 = vmatprep.subr.bf16.mxu0 0
        %669 = vmatpush1.bf16.msra.mxu0 0
        %670 = vmatprep.subr.bf16.mxu0 0
        %671 = vmatpush1.bf16.msra.mxu0 0
        %672 = vmatprep.subr.bf16.mxu0 0
        %673 = vmatpush1.bf16.msra.mxu0 0
        %674 = vmatprep.subr.bf16.mxu0 0
        %675 = vmatpush1.bf16.msra.mxu0 0
        %676 = vmatprep.subr.bf16.mxu0 0
        %677 = vmatpush1.bf16.msra.mxu0 0
        %678 = vmatprep.subr.bf16.mxu0 0
        %679 = vmatpush1.bf16.msra.mxu0 0
        %680 = vmatprep.mubr.bf16.mxu0 0
        %681 = vmatmul.mubr.bf16.gmra.mrb[0].mxu0 %v643
        %v682 = vpop.f32.mrb[0].mxu0
        %v683 = vadd.f32 0.0, %v682
        %v684 = vpop.f32.mrb[0].mxu0
        %v685 = vpop.f32.mrb[0].mxu0
        %v686 = vpop.f32.mrb[0].mxu0
        %687 = vdwg.mxu0
        %v688 = vadd.f32 %v632, %v683
        %s689 = scalar_lea.vmem %s169, 18
        %v690 = vld [vmem:[%s689] sm:$0x3]
        %v691 = vld [vmem:[%s233] sm:$0xf]
        %v692 = vld [vmem:[%s233 + $0x4] sm:$0x3]
        %v695 = vunpack.c.l.b16 %v691
        %v696 = vunpack.c.l.b16 %v692
        %v697 = vpack.c.b16 %v696, %v695
        %v699 = vsel %vm182, %v690, 0
        %v702 = vsel %vm186, %v697, 0
        %704 = vmatprep.subr.bf16.mxu0 0
        %705 = vmatpush1.bf16.msra.mxu0 %v702
        %706 = vmatprep.subr.bf16.mxu0 0
        %707 = vmatpush1.bf16.msra.mxu0 0
        %708 = vmatprep.subr.bf16.mxu0 0
        %709 = vmatpush1.bf16.msra.mxu0 0
        %710 = vmatprep.subr.bf16.mxu0 0
        %711 = vmatpush1.bf16.msra.mxu0 0
        %712 = vmatprep.subr.bf16.mxu0 0
        %713 = vmatpush1.bf16.msra.mxu0 0
        %714 = vmatprep.subr.bf16.mxu0 0
        %715 = vmatpush1.bf16.msra.mxu0 0
        %716 = vmatprep.subr.bf16.mxu0 0
        %717 = vmatpush1.bf16.msra.mxu0 0
        %718 = vmatprep.subr.bf16.mxu0 0
        %719 = vmatpush1.bf16.msra.mxu0 0
        %720 = vmatprep.subr.bf16.mxu0 0
        %721 = vmatpush1.bf16.msra.mxu0 0
        %722 = vmatprep.subr.bf16.mxu0 0
        %723 = vmatpush1.bf16.msra.mxu0 0
        %724 = vmatprep.subr.bf16.mxu0 0
        %725 = vmatpush1.bf16.msra.mxu0 0
        %726 = vmatprep.subr.bf16.mxu0 0
        %727 = vmatpush1.bf16.msra.mxu0 0
        %728 = vmatprep.subr.bf16.mxu0 0
        %729 = vmatpush1.bf16.msra.mxu0 0
        %730 = vmatprep.subr.bf16.mxu0 0
        %731 = vmatpush1.bf16.msra.mxu0 0
        %732 = vmatprep.subr.bf16.mxu0 0
        %733 = vmatpush1.bf16.msra.mxu0 0
        %734 = vmatprep.subr.bf16.mxu0 0
        %735 = vmatpush1.bf16.msra.mxu0 0
        %736 = vmatprep.mubr.bf16.mxu0 0
        %737 = vmatmul.mubr.bf16.gmra.mrb[0].mxu0 %v699
        %v738 = vpop.f32.mrb[0].mxu0
        %v739 = vadd.f32 0.0, %v738
        %v740 = vpop.f32.mrb[0].mxu0
        %v741 = vpop.f32.mrb[0].mxu0
        %v742 = vpop.f32.mrb[0].mxu0
        %743 = vdwg.mxu0
        %v744 = vadd.f32 %v688, %v739
        %s745 = scalar_lea.vmem %s169, 20
        %v746 = vld [vmem:[%s745] sm:$0x3]
        %v747 = vld [vmem:[%s290] sm:$0xf]
        %v748 = vld [vmem:[%s290 + $0x4] sm:$0x3]
        %v751 = vunpack.c.l.b16 %v747
        %v752 = vunpack.c.l.b16 %v748
        %v753 = vpack.c.b16 %v752, %v751
        %v755 = vsel %vm182, %v746, 0
        %v758 = vsel %vm186, %v753, 0
        %760 = vmatprep.subr.bf16.mxu0 0
        %761 = vmatpush1.bf16.msra.mxu0 %v758
        %762 = vmatprep.subr.bf16.mxu0 0
        %763 = vmatpush1.bf16.msra.mxu0 0
        %764 = vmatprep.subr.bf16.mxu0 0
        %765 = vmatpush1.bf16.msra.mxu0 0
        %766 = vmatprep.subr.bf16.mxu0 0
        %767 = vmatpush1.bf16.msra.mxu0 0
        %768 = vmatprep.subr.bf16.mxu0 0
        %769 = vmatpush1.bf16.msra.mxu0 0
        %770 = vmatprep.subr.bf16.mxu0 0
        %771 = vmatpush1.bf16.msra.mxu0 0
        %772 = vmatprep.subr.bf16.mxu0 0
        %773 = vmatpush1.bf16.msra.mxu0 0
        %774 = vmatprep.subr.bf16.mxu0 0
        %775 = vmatpush1.bf16.msra.mxu0 0
        %776 = vmatprep.subr.bf16.mxu0 0
        %777 = vmatpush1.bf16.msra.mxu0 0
        %778 = vmatprep.subr.bf16.mxu0 0
        %779 = vmatpush1.bf16.msra.mxu0 0
        %780 = vmatprep.subr.bf16.mxu0 0
        %781 = vmatpush1.bf16.msra.mxu0 0
        %782 = vmatprep.subr.bf16.mxu0 0
        %783 = vmatpush1.bf16.msra.mxu0 0
        %784 = vmatprep.subr.bf16.mxu0 0
        %785 = vmatpush1.bf16.msra.mxu0 0
        %786 = vmatprep.subr.bf16.mxu0 0
        %787 = vmatpush1.bf16.msra.mxu0 0
        %788 = vmatprep.subr.bf16.mxu0 0
        %789 = vmatpush1.bf16.msra.mxu0 0
        %790 = vmatprep.subr.bf16.mxu0 0
        %791 = vmatpush1.bf16.msra.mxu0 0
        %792 = vmatprep.mubr.bf16.mxu0 0
        %793 = vmatmul.mubr.bf16.gmra.mrb[0].mxu0 %v755
        %v794 = vpop.f32.mrb[0].mxu0
        %v795 = vadd.f32 0.0, %v794
        %v796 = vpop.f32.mrb[0].mxu0
        %v797 = vpop.f32.mrb[0].mxu0
        %v798 = vpop.f32.mrb[0].mxu0
        %799 = vdwg.mxu0
        %v800 = vadd.f32 %v744, %v795
        %s801 = scalar_lea.vmem %s169, 22
        %v802 = vld [vmem:[%s801] sm:$0x3]
        %v803 = vld [vmem:[%s347] sm:$0xf]
        %v804 = vld [vmem:[%s347 + $0x4] sm:$0x3]
        %v807 = vunpack.c.l.b16 %v803
        %v808 = vunpack.c.l.b16 %v804
        %v809 = vpack.c.b16 %v808, %v807
        %v811 = vsel %vm182, %v802, 0
        %v814 = vsel %vm186, %v809, 0
        %816 = vmatprep.subr.bf16.mxu0 0
        %817 = vmatpush1.bf16.msra.mxu0 %v814
        %818 = vmatprep.subr.bf16.mxu0 0
        %819 = vmatpush1.bf16.msra.mxu0 0
        %820 = vmatprep.subr.bf16.mxu0 0
        %821 = vmatpush1.bf16.msra.mxu0 0
        %822 = vmatprep.subr.bf16.mxu0 0
        %823 = vmatpush1.bf16.msra.mxu0 0
        %824 = vmatprep.subr.bf16.mxu0 0
        %825 = vmatpush1.bf16.msra.mxu0 0
        %826 = vmatprep.subr.bf16.mxu0 0
        %827 = vmatpush1.bf16.msra.mxu0 0
        %828 = vmatprep.subr.bf16.mxu0 0
        %829 = vmatpush1.bf16.msra.mxu0 0
        %830 = vmatprep.subr.bf16.mxu0 0
        %831 = vmatpush1.bf16.msra.mxu0 0
        %832 = vmatprep.subr.bf16.mxu0 0
        %833 = vmatpush1.bf16.msra.mxu0 0
        %834 = vmatprep.subr.bf16.mxu0 0
        %835 = vmatpush1.bf16.msra.mxu0 0
        %836 = vmatprep.subr.bf16.mxu0 0
        %837 = vmatpush1.bf16.msra.mxu0 0
        %838 = vmatprep.subr.bf16.mxu0 0
        %839 = vmatpush1.bf16.msra.mxu0 0
        %840 = vmatprep.subr.bf16.mxu0 0
        %841 = vmatpush1.bf16.msra.mxu0 0
        %842 = vmatprep.subr.bf16.mxu0 0
        %843 = vmatpush1.bf16.msra.mxu0 0
        %844 = vmatprep.subr.bf16.mxu0 0
        %845 = vmatpush1.bf16.msra.mxu0 0
        %846 = vmatprep.subr.bf16.mxu0 0
        %847 = vmatpush1.bf16.msra.mxu0 0
        %848 = vmatprep.mubr.bf16.mxu0 0
        %849 = vmatmul.mubr.bf16.gmra.mrb[0].mxu0 %v811
        %v850 = vpop.f32.mrb[0].mxu0
        %v851 = vadd.f32 0.0, %v850
        %v852 = vpop.f32.mrb[0].mxu0
        %v853 = vpop.f32.mrb[0].mxu0
        %v854 = vpop.f32.mrb[0].mxu0
        %855 = vdwg.mxu0
        %v856 = vadd.f32 %v800, %v851
        %s857 = scalar_lea.vmem %s164, 8 [#allocation2]
        %858 = vst [vmem:[%s857] sm:$0xf] %v856
        %s859 = scalar_lea.vmem %s2, 12
        %v860 = vld [vmem:[%s859] sm:$0xf]
        %s861 = scalar_lea.vmem %s169, 24
        %v862 = vld [vmem:[%s861] sm:$0x3]
        %v863 = vld [vmem:[%s1] sm:$0xf]
        %v864 = vld [vmem:[%s1 + $0x4] sm:$0x3]
        %v867 = vunpack.c.l.b16 %v863
        %v868 = vunpack.c.l.b16 %v864
        %v869 = vpack.c.b16 %v868, %v867
        %v871 = vsel %vm182, %v862, 0
        %v874 = vsel %vm186, %v869, 0
        %876 = vmatprep.subr.bf16.mxu0 0
        %877 = vmatpush1.bf16.msra.mxu0 %v874
        %878 = vmatprep.subr.bf16.mxu0 0
        %879 = vmatpush1.bf16.msra.mxu0 0
        %880 = vmatprep.subr.bf16.mxu0 0
        %881 = vmatpush1.bf16.msra.mxu0 0
        %882 = vmatprep.subr.bf16.mxu0 0
        %883 = vmatpush1.bf16.msra.mxu0 0
        %884 = vmatprep.subr.bf16.mxu0 0
        %885 = vmatpush1.bf16.msra.mxu0 0
        %886 = vmatprep.subr.bf16.mxu0 0
        %887 = vmatpush1.bf16.msra.mxu0 0
        %888 = vmatprep.subr.bf16.mxu0 0
        %889 = vmatpush1.bf16.msra.mxu0 0
        %890 = vmatprep.subr.bf16.mxu0 0
        %891 = vmatpush1.bf16.msra.mxu0 0
        %892 = vmatprep.subr.bf16.mxu0 0
        %893 = vmatpush1.bf16.msra.mxu0 0
        %894 = vmatprep.subr.bf16.mxu0 0
        %895 = vmatpush1.bf16.msra.mxu0 0
        %896 = vmatprep.subr.bf16.mxu0 0
        %897 = vmatpush1.bf16.msra.mxu0 0
        %898 = vmatprep.subr.bf16.mxu0 0
        %899 = vmatpush1.bf16.msra.mxu0 0
        %900 = vmatprep.subr.bf16.mxu0 0
        %901 = vmatpush1.bf16.msra.mxu0 0
        %902 = vmatprep.subr.bf16.mxu0 0
        %903 = vmatpush1.bf16.msra.mxu0 0
        %904 = vmatprep.subr.bf16.mxu0 0
        %905 = vmatpush1.bf16.msra.mxu0 0
        %906 = vmatprep.subr.bf16.mxu0 0
        %907 = vmatpush1.bf16.msra.mxu0 0
        %908 = vmatprep.mubr.bf16.mxu0 0
        %909 = vmatmul.mubr.bf16.gmra.mrb[0].mxu0 %v871
        %v910 = vpop.f32.mrb[0].mxu0
        %v911 = vadd.f32 0.0, %v910
        %v912 = vpop.f32.mrb[0].mxu0
        %v913 = vpop.f32.mrb[0].mxu0
        %v914 = vpop.f32.mrb[0].mxu0
        %915 = vdwg.mxu0
        %v916 = vadd.f32 %v860, %v911
        %s917 = scalar_lea.vmem %s169, 26
        %v918 = vld [vmem:[%s917] sm:$0x3]
        %v919 = vld [vmem:[%s233] sm:$0xf]
        %v920 = vld [vmem:[%s233 + $0x4] sm:$0x3]
        %v923 = vunpack.c.l.b16 %v919
        %v924 = vunpack.c.l.b16 %v920
        %v925 = vpack.c.b16 %v924, %v923
        %v927 = vsel %vm182, %v918, 0
        %v930 = vsel %vm186, %v925, 0
        %932 = vmatprep.subr.bf16.mxu0 0
        %933 = vmatpush1.bf16.msra.mxu0 %v930
        %934 = vmatprep.subr.bf16.mxu0 0
        %935 = vmatpush1.bf16.msra.mxu0 0
        %936 = vmatprep.subr.bf16.mxu0 0
        %937 = vmatpush1.bf16.msra.mxu0 0
        %938 = vmatprep.subr.bf16.mxu0 0
        %939 = vmatpush1.bf16.msra.mxu0 0
        %940 = vmatprep.subr.bf16.mxu0 0
        %941 = vmatpush1.bf16.msra.mxu0 0
        %942 = vmatprep.subr.bf16.mxu0 0
        %943 = vmatpush1.bf16.msra.mxu0 0
        %944 = vmatprep.subr.bf16.mxu0 0
        %945 = vmatpush1.bf16.msra.mxu0 0
        %946 = vmatprep.subr.bf16.mxu0 0
        %947 = vmatpush1.bf16.msra.mxu0 0
        %948 = vmatprep.subr.bf16.mxu0 0
        %949 = vmatpush1.bf16.msra.mxu0 0
        %950 = vmatprep.subr.bf16.mxu0 0
        %951 = vmatpush1.bf16.msra.mxu0 0
        %952 = vmatprep.subr.bf16.mxu0 0
        %953 = vmatpush1.bf16.msra.mxu0 0
        %954 = vmatprep.subr.bf16.mxu0 0
        %955 = vmatpush1.bf16.msra.mxu0 0
        %956 = vmatprep.subr.bf16.mxu0 0
        %957 = vmatpush1.bf16.msra.mxu0 0
        %958 = vmatprep.subr.bf16.mxu0 0
        %959 = vmatpush1.bf16.msra.mxu0 0
        %960 = vmatprep.subr.bf16.mxu0 0
        %961 = vmatpush1.bf16.msra.mxu0 0
        %962 = vmatprep.subr.bf16.mxu0 0
        %963 = vmatpush1.bf16.msra.mxu0 0
        %964 = vmatprep.mubr.bf16.mxu0 0
        %965 = vmatmul.mubr.bf16.gmra.mrb[0].mxu0 %v927
        %v966 = vpop.f32.mrb[0].mxu0
        %v967 = vadd.f32 0.0, %v966
        %v968 = vpop.f32.mrb[0].mxu0
        %v969 = vpop.f32.mrb[0].mxu0
        %v970 = vpop.f32.mrb[0].mxu0
        %971 = vdwg.mxu0
        %v972 = vadd.f32 %v916, %v967
        %s973 = scalar_lea.vmem %s169, 28
        %v974 = vld [vmem:[%s973] sm:$0x3]
        %v975 = vld [vmem:[%s290] sm:$0xf]
        %v976 = vld [vmem:[%s290 + $0x4] sm:$0x3]
        %v979 = vunpack.c.l.b16 %v975
        %v980 = vunpack.c.l.b16 %v976
        %v981 = vpack.c.b16 %v980, %v979
        %v983 = vsel %vm182, %v974, 0
        %v986 = vsel %vm186, %v981, 0
        %988 = vmatprep.subr.bf16.mxu0 0
        %989 = vmatpush1.bf16.msra.mxu0 %v986
        %990 = vmatprep.subr.bf16.mxu0 0
        %991 = vmatpush1.bf16.msra.mxu0 0
        %992 = vmatprep.subr.bf16.mxu0 0
        %993 = vmatpush1.bf16.msra.mxu0 0
        %994 = vmatprep.subr.bf16.mxu0 0
        %995 = vmatpush1.bf16.msra.mxu0 0
        %996 = vmatprep.subr.bf16.mxu0 0
        %997 = vmatpush1.bf16.msra.mxu0 0
        %998 = vmatprep.subr.bf16.mxu0 0
        %999 = vmatpush1.bf16.msra.mxu0 0
        %1000 = vmatprep.subr.bf16.mxu0 0
        %1001 = vmatpush1.bf16.msra.mxu0 0
        %1002 = vmatprep.subr.bf16.mxu0 0
        %1003 = vmatpush1.bf16.msra.mxu0 0
        %1004 = vmatprep.subr.bf16.mxu0 0
        %1005 = vmatpush1.bf16.msra.mxu0 0
        %1006 = vmatprep.subr.bf16.mxu0 0
        %1007 = vmatpush1.bf16.msra.mxu0 0
        %1008 = vmatprep.subr.bf16.mxu0 0
        %1009 = vmatpush1.bf16.msra.mxu0 0
        %1010 = vmatprep.subr.bf16.mxu0 0
        %1011 = vmatpush1.bf16.msra.mxu0 0
        %1012 = vmatprep.subr.bf16.mxu0 0
        %1013 = vmatpush1.bf16.msra.mxu0 0
        %1014 = vmatprep.subr.bf16.mxu0 0
        %1015 = vmatpush1.bf16.msra.mxu0 0
        %1016 = vmatprep.subr.bf16.mxu0 0
        %1017 = vmatpush1.bf16.msra.mxu0 0
        %1018 = vmatprep.subr.bf16.mxu0 0
        %1019 = vmatpush1.bf16.msra.mxu0 0
        %1020 = vmatprep.mubr.bf16.mxu0 0
        %1021 = vmatmul.mubr.bf16.gmra.mrb[0].mxu0 %v983
        %v1022 = vpop.f32.mrb[0].mxu0
        %v1023 = vadd.f32 0.0, %v1022
        %v1024 = vpop.f32.mrb[0].mxu0
        %v1025 = vpop.f32.mrb[0].mxu0
        %v1026 = vpop.f32.mrb[0].mxu0
        %1027 = vdwg.mxu0
        %v1028 = vadd.f32 %v972, %v1023
        %s1029 = scalar_lea.vmem %s169, 30
        %v1030 = vld [vmem:[%s1029] sm:$0x3]
        %v1031 = vld [vmem:[%s347] sm:$0xf]
        %v1032 = vld [vmem:[%s347 + $0x4] sm:$0x3]
        %v1035 = vunpack.c.l.b16 %v1031
        %v1036 = vunpack.c.l.b16 %v1032
        %v1037 = vpack.c.b16 %v1036, %v1035
        %v1039 = vsel %vm182, %v1030, 0
        %v1042 = vsel %vm186, %v1037, 0
        %1044 = vmatprep.subr.bf16.mxu0 0
        %1045 = vmatpush1.bf16.msra.mxu0 %v1042
        %1046 = vmatprep.subr.bf16.mxu0 0
        %1047 = vmatpush1.bf16.msra.mxu0 0
        %1048 = vmatprep.subr.bf16.mxu0 0
        %1049 = vmatpush1.bf16.msra.mxu0 0
        %1050 = vmatprep.subr.bf16.mxu0 0
        %1051 = vmatpush1.bf16.msra.mxu0 0
        %1052 = vmatprep.subr.bf16.mxu0 0
        %1053 = vmatpush1.bf16.msra.mxu0 0
        %1054 = vmatprep.subr.bf16.mxu0 0
        %1055 = vmatpush1.bf16.msra.mxu0 0
        %1056 = vmatprep.subr.bf16.mxu0 0
        %1057 = vmatpush1.bf16.msra.mxu0 0
        %1058 = vmatprep.subr.bf16.mxu0 0
        %1059 = vmatpush1.bf16.msra.mxu0 0
        %1060 = vmatprep.subr.bf16.mxu0 0
        %1061 = vmatpush1.bf16.msra.mxu0 0
        %1062 = vmatprep.subr.bf16.mxu0 0
        %1063 = vmatpush1.bf16.msra.mxu0 0
        %1064 = vmatprep.subr.bf16.mxu0 0
        %1065 = vmatpush1.bf16.msra.mxu0 0
        %1066 = vmatprep.subr.bf16.mxu0 0
        %1067 = vmatpush1.bf16.msra.mxu0 0
        %1068 = vmatprep.subr.bf16.mxu0 0
        %1069 = vmatpush1.bf16.msra.mxu0 0
        %1070 = vmatprep.subr.bf16.mxu0 0
        %1071 = vmatpush1.bf16.msra.mxu0 0
        %1072 = vmatprep.subr.bf16.mxu0 0
        %1073 = vmatpush1.bf16.msra.mxu0 0
        %1074 = vmatprep.subr.bf16.mxu0 0
        %1075 = vmatpush1.bf16.msra.mxu0 0
        %1076 = vmatprep.mubr.bf16.mxu0 0
        %1077 = vmatmul.mubr.bf16.gmra.mrb[0].mxu0 %v1039
        %v1078 = vpop.f32.mrb[0].mxu0
        %v1079 = vadd.f32 0.0, %v1078
        %v1080 = vpop.f32.mrb[0].mxu0
        %v1081 = vpop.f32.mrb[0].mxu0
        %v1082 = vpop.f32.mrb[0].mxu0
        %1083 = vdwg.mxu0
        %v1084 = vadd.f32 %v1028, %v1079
        %s1085 = scalar_lea.vmem %s164, 12 [#allocation2]
        %1086 = vst [vmem:[%s1085] sm:$0xf] %v1084
        %s1087 = sand.u32 %s93, 1
        %s1088 = scalar_lea.sflag [#allocation3], %s1087
        %s1089 = sand.u32 %s93, 1
        %s1090 = smul.addr %s1089, 16
        %s1091 = scalar_lea.vmem [#allocation2], %s1090
        // Predicated region
        $region33: #{tpu_custom_call.1} parent=31 // pred_check
          %p1092 = pneg %p103
        $region34: #{tpu_custom_call.1} parent=31 // pred_check_branch
          %1094 = sbr.rel (%p1092) target = $region36
        $region35: #{tpu_custom_call.1} parent=31 // pred_region
          %s1095 = smul.u32 4, %s17
          %s1097 = ssub.s32 256, 256
          %1098 = vsyncadd %s1088, %s1097
          %s1099 = smul.addr %s1095, 64
          %s1100 = scalar_lea.hbm %s3, %s1099
          %s1101 = sshll.u32 %s1091, 4
          %s1102 = int_to_ptr.vmem [resolvable:$true] %s1101
          %1107 = dma.vmem_to_hbm [thread:$0]  %s1102, 256, %s1100, %s1088, 64, 64, 4
        $region36: #{tpu_custom_call.1} parent=31 // pred_fallthru
          _
      $region32: #{tpu_custom_call.1} parent=5 // pred_fallthru
        _
      %p1108 = scmp.le.s32.totalorder 2, %s12
      // Predicated region
      $region37: #{tpu_custom_call.1} parent=5 // pred_check
        %p1109 = pneg %p1108
      $region38: #{tpu_custom_call.1} parent=5 // pred_check_branch
        %1111 = sbr.rel (%p1109) target = $region40
      $region39: #{tpu_custom_call.1} parent=5 // pred_region
        %s1112 = ssub.s32 %s12, 2
        // Predicated region
        $region41: #{tpu_custom_call.1} parent=39 // pred_check
          %p1113 = pneg %p109
        $region42: #{tpu_custom_call.1} parent=39 // pred_check_branch
          %1115 = sbr.rel (%p1113) target = $region44
        $region43: #{tpu_custom_call.1} parent=39 // pred_region
          %s1116 = sand.u32 %s94, 1
          %s1117 = scalar_lea.sflag [#allocation3], %s1116
          %s1118 = sand.u32 %s94, 1
          %s1119 = smul.addr %s1118, 16
          %s1120 = scalar_lea.vmem [#allocation2], %s1119
          %1121 = dma.done %s1117, 256
        $region44: #{tpu_custom_call.1} parent=39 // pred_fallthru
          _
      $region40: #{tpu_custom_call.1} parent=5 // pred_fallthru
        _
    $region6: #{tpu_custom_call.1} parent=1 // loop_footer
      %s16 = sadd.s32 1, %s12
    $region7: #{tpu_custom_call.1} parent=1 // loop_footer_branch
      %11 = sbr.rel target = $region3
    $region8: #{tpu_custom_call.1} parent=1 // loop_exit
      _
    %1122 = vsyncpa [#allocation3], 1
    %s1123 = scalar_lea.sflag [#allocation3], 1
    %1124 = vsyncpa %s1123, 1

</llo_original>
